<compile_context>
chip_gen: v6e
topology: v6e:2x2x1
jax: 0.10.0
libtpu: 0.0.40
codegen_flags: <defaults>
</compile_context>

<pallas_src>
import functools

import jax
import jax.numpy as jnp
from jax.experimental import pallas as pl
from jax.experimental.pallas import tpu as pltpu


def tc_kernel(xt_ref, xres_ref, w1_ref, w2_ref, b1_ref, b2_ref, wp_ref, bp_ref,
              out_ref, *, TQ, W, C, pad_h):
    """One (batch, row-tile) grid step.  Activations are (channels, TQ*W)."""
    Lt = TQ * W

    # Haloed bf16 image tile: (C, (TQ + 2*pad_h) * W).  Row r / col c of the
    # tile's output pixels live at lane r*W + c.  Load once, slice 18 windows.
    xt = xt_ref[0, 0, :, :]

    # Column-edge masks (conv zero padding in W): windows with dx != 0 wrap
    # across image rows in the flattened layout; the mask zeroes those lanes.
    col = jax.lax.broadcasted_iota(jnp.int32, (1, Lt), 1) % W
    masks = {dx: (col >= -dx) & (col < W - dx) for dx in (-3, -1, 1, 3)}

    def window(dy, dx):
        off = (pad_h + dy) * W + dx            # static lane offset in the tile
        win = xt[:, off:off + Lt]              # (C, Lt) bf16
        if dx != 0:
            win = jnp.where(masks[dx], win, jnp.zeros_like(win))
        return win

    taps = [(ky - 1, kx - 1) for ky in range(3) for kx in range(3)]
    # bf16 im2col patches (9*C, Lt): one MXU matmul per conv (no f32 temporaries).
    p_di = jnp.concatenate([window(3 * dy, 3 * dx) for dy, dx in taps], axis=0)
    p_dw = jnp.concatenate([window(dy, dx) for dy, dx in taps], axis=0)

    # diconv fused with wq, dwconv fused with wk (biases folded through too).
    a1q = jnp.dot(w1_ref[...], p_di, preferred_element_type=jnp.float32) + b1_ref[...]
    a2k = jnp.dot(w2_ref[...], p_dw, preferred_element_type=jnp.float32) + b2_ref[...]
    # (C//2, Lt) float32 each.

    # channel mean / max of concat([a1q, a2k]) — cheap sublane reductions.
    avg = (jnp.sum(a1q, axis=0, keepdims=True) +
           jnp.sum(a2k, axis=0, keepdims=True)) * (1.0 / C)
    mx = jnp.maximum(jnp.max(a1q, axis=0, keepdims=True),
                     jnp.max(a2k, axis=0, keepdims=True))

    # Row softmax over W: each image row is a whole W-lane segment of the tile,
    # so a tiny (2, TQ, W) reshape gives an exact per-row max / sum.  denom >= 1
    # (the max element contributes exp(0) = 1), so the approx reciprocal is safe.
    v = jnp.concatenate([avg, mx], axis=0).reshape(2, TQ, W)
    m = jnp.max(v, axis=-1, keepdims=True)
    e = jnp.exp(v - m)
    denom = jnp.sum(e, axis=-1, keepdims=True)
    scale = (e * pl.reciprocal(denom, approx=True)).reshape(2, Lt)

    # 1x1 conv (proj) as ONE fused (C, C) @ (C, Lt) matmul over the
    # concatenated, softmax-scaled halves; f32 accumulation.
    n_attn = jnp.concatenate(
        [(a1q * scale[0:1, :]).astype(jnp.bfloat16),
         (a2k * scale[1:2, :]).astype(jnp.bfloat16)], axis=0)        # (C, Lt)
    proj = jnp.dot(wp_ref[...], n_attn,
                   preferred_element_type=jnp.float32) + bp_ref[...]  # (C, Lt)

    # Residual multiply in float32 (separate f32 residual stream).
    out_ref[0] = (xres_ref[0] * proj).astype(out_ref.dtype)


def _pick_row_tile(H, W):
    """Rows per tile: flattened lane width a multiple of 128 (dense unmasked
    stores) and >= 512 lanes when possible; falls back to the whole image."""
    aligned = [tq for tq in range(1, H + 1) if H % tq == 0 and (tq * W) % 128 == 0]
    for tq in aligned:
        if tq * W >= 512:
            return tq
    return aligned[0] if aligned else H


@jax.jit
def tc_forward(x_nchw, params):
    """Pallas forward. x_nchw: (B, C, H, W) float32 -> (B, C, H, W) float32."""
    wdi, bdi, wdw, bdw, wq, wk, wproj, bproj = params
    B, C, H, W = x_nchw.shape
    assert C % 2 == 0
    pad_h = 4              # >= 3 (dilation-3 reach) + 1 so every flattened
                           # window-slice start stays >= 0 inside the tile.
    TQ = _pick_row_tile(H, W)
    n_t = H // TQ
    Lt = TQ * W
    Lh = (TQ + 2 * pad_h) * W
    hp = jax.lax.Precision.HIGHEST

    x = x_nchw.astype(jnp.float32)

    # Conv-input stream: bf16, zero-padded in H, cut into per-tile blocks with
    # a pad_h-row halo on each side -> static in-kernel window offsets, bounded
    # per-step VMEM, real DMA/compute overlap from the auto-pipeliner.
    xpad = jnp.pad(x, ((0, 0), (0, 0), (pad_h, pad_h), (0, 0))).astype(jnp.bfloat16)
    xtiles = jnp.stack(
        [xpad[:, :, t * TQ: t * TQ + TQ + 2 * pad_h, :] for t in range(n_t)],
        axis=1).reshape(B, n_t, C, Lh)

    # Residual stream stays float32 (flattened NCHW; zero-copy reshape).
    xres = x.reshape(B, C, H * W)

    # Fold wq into the 9 dilated-conv taps and wk into the 9 depthwise taps.
    w1 = jnp.einsum('kio,oq->qki', wdi, wq,
                    precision=hp).reshape(C // 2, 9 * C).astype(jnp.bfloat16)
    w2 = jnp.einsum('cq,kc->qkc', wk, wdw,
                    precision=hp).reshape(C // 2, 9 * C).astype(jnp.bfloat16)
    b1 = jnp.matmul(bdi[0], wq, precision=hp)[:, None].astype(jnp.float32)
    b2 = jnp.matmul(bdw[0], wk, precision=hp)[:, None].astype(jnp.float32)
    # Single fused projection weight: rows = out channels, cols = [a1 | a2] halves.
    wp = wproj.T.astype(jnp.bfloat16)                      # (C, C)
    bp = bproj[0][:, None].astype(jnp.float32)             # (C, 1)

    # Scoped-VMEM budget sized to the real per-step working set, clamped so it
    # is valid from v5e (16 MiB default) up to v7x (64 MiB physical).
    block_bytes = 2 * (C * Lh * 2 + 2 * C * Lt * 4)                  # pipelined blocks (x2 buffers)
    weight_bytes = 2 * (2 * (C // 2) * 9 * C * 2 + C * C * 2 + 3 * C * 4)
    temp_bytes = 2 * 9 * C * Lt * 2 + 6 * C * Lt * 4                 # bf16 patches + f32 activations
    vmem_bytes = int(min(64 * 1024 * 1024,
                         max(16 * 1024 * 1024,
                             2 * (block_bytes + weight_bytes + temp_bytes))))

    kernel = functools.partial(tc_kernel, TQ=TQ, W=W, C=C, pad_h=pad_h)
    out = pl.pallas_call(
        kernel,
        out_shape=jax.ShapeDtypeStruct((B, C, H * W), jnp.float32),
        grid=(B, n_t),
        in_specs=[
            pl.BlockSpec((1, 1, C, Lh), lambda b, t: (b, t, 0, 0)),   # haloed bf16 tile
            pl.BlockSpec((1, C, Lt), lambda b, t: (b, 0, t)),         # f32 residual tile
            pl.BlockSpec((C // 2, 9 * C), lambda b, t: (0, 0)),       # w1 (diconv ∘ wq)
            pl.BlockSpec((C // 2, 9 * C), lambda b, t: (0, 0)),       # w2 (dwconv ∘ wk)
            pl.BlockSpec((C // 2, 1), lambda b, t: (0, 0)),           # b1
            pl.BlockSpec((C // 2, 1), lambda b, t: (0, 0)),           # b2
            pl.BlockSpec((C, C), lambda b, t: (0, 0)),                # wproj^T (fused)
            pl.BlockSpec((C, 1), lambda b, t: (0, 0)),                # bproj
        ],
        out_specs=pl.BlockSpec((1, C, Lt), lambda b, t: (b, 0, t)),
        compiler_params=pltpu.CompilerParams(
            dimension_semantics=("parallel", "parallel"),
            vmem_limit_bytes=vmem_bytes),
    )(xtiles, xres, w1, w2, b1, b2, wp, bp)
    # (B, C, H*W) is flattened NCHW -> free reshape, no transposes needed.
    return out.reshape(B, C, H, W)


def tc_reference(x_nchw, params):
    """Pure-JAX reference of the same forward (independent check)."""
    wdi, bdi, wdw, bdw, wq, wk, wproj, bproj = params
    B, C, H, W = x_nchw.shape
    x = jnp.transpose(x_nchw, (0, 2, 3, 1)).astype(jnp.float32)
    hp = jax.lax.Precision.HIGHEST
    a1 = jax.lax.conv_general_dilated(
        x, wdi.reshape(3, 3, C, C), (1, 1), ((3, 3), (3, 3)),
        rhs_dilation=(3, 3), dimension_numbers=("NHWC", "HWIO", "NHWC"),
        precision=hp) + bdi[0]
    a2 = jax.lax.conv_general_dilated(
        x, wdw.reshape(3, 3, 1, C), (1, 1), ((1, 1), (1, 1)),
        dimension_numbers=("NHWC", "HWIO", "NHWC"),
        feature_group_count=C, precision=hp) + bdw[0]
    a1q = jnp.einsum("bhwc,cd->bhwd", a1, wq, precision=hp)
    a2k = jnp.einsum("bhwc,cd->bhwd", a2, wk, precision=hp)
    attn = jnp.concatenate([a1q, a2k], axis=-1)
    avg = jax.nn.softmax(jnp.mean(attn, axis=-1, keepdims=True), axis=2)  # W axis
    mx = jax.nn.softmax(jnp.max(attn, axis=-1, keepdims=True), axis=2)
    n_attn = jnp.concatenate([avg * a1q, mx * a2k], axis=-1)
    out = jnp.einsum("bhwc,cd->bhwd", n_attn, wproj, precision=hp) + bproj[0]
    out = x * out
    return jnp.transpose(out, (0, 3, 1, 2))


def make_params(key, dim):
    ks = jax.random.split(key, 8)
    s = 0.1
    wdi = jax.random.normal(ks[0], (9, dim, dim), jnp.float32) * s      # (tap, Cin, Cout)
    bdi = jax.random.normal(ks[1], (1, dim), jnp.float32) * s
    wdw = jax.random.normal(ks[2], (9, dim), jnp.float32) * s           # (tap, C)
    bdw = jax.random.normal(ks[3], (1, dim), jnp.float32) * s
    wq = jax.random.normal(ks[4], (dim, dim // 2), jnp.float32) * s     # (Cin, Cout), no bias
    wk = jax.random.normal(ks[5], (dim, dim // 2), jnp.float32) * s
    wproj = jax.random.normal(ks[6], (dim, dim), jnp.float32) * s       # (Cin, Cout)
    bproj = jax.random.normal(ks[7], (1, dim), jnp.float32) * s
    return (wdi, bdi, wdw, bdw, wq, wk, wproj, bproj)


if __name__ == "__main__":
    key = jax.random.PRNGKey(0)
    k_x, k_p = jax.random.split(key)
    B, C, H, W = 2, 8, 16, 16
    x = jax.random.normal(k_x, (B, C, H, W), jnp.float32)
    params = make_params(k_p, C)

    out = jax.block_until_ready(tc_forward(x, params))
    ref = jax.block_until_ready(tc_reference(x, params))
    assert out.shape == (B, C, H, W)
    # bf16 matmul operands with f32 accumulation -> slightly looser tolerance.
    err = float(jnp.max(jnp.abs(out - ref)))
    assert jnp.allclose(out, ref, atol=2e-2, rtol=2e-2), err

    print("KERNEL_OK")
</pallas_src>

<mosaic_0001>
module attributes {stable_mosaic.version = 11 : i64} {
  func.func @tc_kernel(%arg0: i32, %arg1: i32, %arg2: memref<1x1x8x256xbf16, #tpu.memory_space<vmem>>, %arg3: memref<1x8x128xf32, #tpu.memory_space<vmem>>, %arg4: memref<4x72xbf16, #tpu.memory_space<vmem>>, %arg5: memref<4x72xbf16, #tpu.memory_space<vmem>>, %arg6: memref<4x1xf32, #tpu.memory_space<vmem>>, %arg7: memref<4x1xf32, #tpu.memory_space<vmem>>, %arg8: memref<8x8xbf16, #tpu.memory_space<vmem>>, %arg9: memref<8x1xf32, #tpu.memory_space<vmem>>, %arg10: memref<1x8x128xf32, #tpu.memory_space<vmem>>) attributes {dimension_semantics = [#tpu.dimension_semantics<parallel>, #tpu.dimension_semantics<parallel>], iteration_bounds = array<i64: 2, 2>, scalar_prefetch = 0 : i64, scratch_operands = 0 : i64, tpu.core_type = #tpu.core_type<tc>, window_params = [{transform_indices = @transform_0, window_bounds = array<i64: 1, 1, 8, 256>}, {transform_indices = @transform_1, window_bounds = array<i64: 1, 8, 128>}, {pipeline_mode = #tpu.pipeline_mode<synchronous>, transform_indices = @transform_2, window_bounds = array<i64: 4, 72>}, {pipeline_mode = #tpu.pipeline_mode<synchronous>, transform_indices = @transform_3, window_bounds = array<i64: 4, 72>}, {pipeline_mode = #tpu.pipeline_mode<synchronous>, transform_indices = @transform_4, window_bounds = array<i64: 4, 1>}, {pipeline_mode = #tpu.pipeline_mode<synchronous>, transform_indices = @transform_5, window_bounds = array<i64: 4, 1>}, {pipeline_mode = #tpu.pipeline_mode<synchronous>, transform_indices = @transform_6, window_bounds = array<i64: 8, 8>}, {pipeline_mode = #tpu.pipeline_mode<synchronous>, transform_indices = @transform_7, window_bounds = array<i64: 8, 1>}, {transform_indices = @transform_8, window_bounds = array<i64: 1, 8, 128>}]} {
    %c0 = arith.constant 0 : index
    %c0_0 = arith.constant 0 : index
    %c0_1 = arith.constant 0 : index
    %c0_2 = arith.constant 0 : index
    %0 = vector.load %arg2[%c0, %c0_0, %c0_1, %c0_2] : memref<1x1x8x256xbf16, #tpu.memory_space<vmem>>, vector<1x1x8x256xbf16>
    %1 = vector.shape_cast %0 : vector<1x1x8x256xbf16> to vector<8x256xbf16>
    %2 = tpu.iota {dimensions = array<i32: 1>} : vector<1x128xi32>
    %c16_i32 = arith.constant 16 : i32
    %c0_i32 = arith.constant 0 : i32
    %3 = arith.cmpi eq, %c16_i32, %c0_i32 : i32
    %c1_i32 = arith.constant 1 : i32
    %4 = arith.select %3, %c1_i32, %c16_i32 : i32
    %5 = vector.broadcast %4 : i32 to vector<1x128xi32>
    %6 = arith.remsi %2, %5 : vector<1x128xi32>
    %c0_i32_3 = arith.constant 0 : i32
    %7 = vector.broadcast %c0_i32_3 : i32 to vector<1x128xi32>
    %8 = arith.cmpi ne, %6, %7 : vector<1x128xi32>
    %c0_i32_4 = arith.constant 0 : i32
    %9 = vector.broadcast %c0_i32_4 : i32 to vector<1x128xi32>
    %10 = arith.cmpi slt, %6, %9 : vector<1x128xi32>
    %c0_i32_5 = arith.constant 0 : i32
    %11 = arith.cmpi slt, %4, %c0_i32_5 : i32
    %12 = vector.broadcast %11 : i1 to vector<1x128xi1>
    %13 = vector.broadcast %12 : vector<1x128xi1> to vector<1x128xi1>
    %14 = arith.xori %10, %13 : vector<1x128xi1>
    %15 = arith.andi %14, %8 : vector<1x128xi1>
    %16 = vector.broadcast %4 : i32 to vector<1x128xi32>
    %17 = arith.addi %6, %16 : vector<1x128xi32>
    %18 = arith.select %15, %17, %6 : vector<1x128xi1>, vector<1x128xi32>
    %c3_i32 = arith.constant 3 : i32
    %19 = vector.broadcast %c3_i32 : i32 to vector<1x128xi32>
    %20 = arith.cmpi sge, %18, %19 : vector<1x128xi32>
    %c19_i32 = arith.constant 19 : i32
    %21 = vector.broadcast %c19_i32 : i32 to vector<1x128xi32>
    %22 = arith.cmpi slt, %18, %21 : vector<1x128xi32>
    %23 = arith.andi %20, %22 : vector<1x128xi1>
    %c1_i32_6 = arith.constant 1 : i32
    %24 = vector.broadcast %c1_i32_6 : i32 to vector<1x128xi32>
    %25 = arith.cmpi sge, %18, %24 : vector<1x128xi32>
    %c17_i32 = arith.constant 17 : i32
    %26 = vector.broadcast %c17_i32 : i32 to vector<1x128xi32>
    %27 = arith.cmpi slt, %18, %26 : vector<1x128xi32>
    %28 = arith.andi %25, %27 : vector<1x128xi1>
    %c-1_i32 = arith.constant -1 : i32
    %29 = vector.broadcast %c-1_i32 : i32 to vector<1x128xi32>
    %30 = arith.cmpi sge, %18, %29 : vector<1x128xi32>
    %c15_i32 = arith.constant 15 : i32
    %31 = vector.broadcast %c15_i32 : i32 to vector<1x128xi32>
    %32 = arith.cmpi slt, %18, %31 : vector<1x128xi32>
    %33 = arith.andi %30, %32 : vector<1x128xi1>
    %c-3_i32 = arith.constant -3 : i32
    %34 = vector.broadcast %c-3_i32 : i32 to vector<1x128xi32>
    %35 = arith.cmpi sge, %18, %34 : vector<1x128xi32>
    %c13_i32 = arith.constant 13 : i32
    %36 = vector.broadcast %c13_i32 : i32 to vector<1x128xi32>
    %37 = arith.cmpi slt, %18, %36 : vector<1x128xi32>
    %38 = arith.andi %35, %37 : vector<1x128xi1>
    %39 = vector.extract_strided_slice %1 {offsets = [0, 13], sizes = [8, 128], strides = [1, 1]} : vector<8x256xbf16> to vector<8x128xbf16>
    %cst = arith.constant 0.000000e+00 : bf16
    %40 = vector.broadcast %cst : bf16 to vector<8x128xbf16>
    %41 = vector.shape_cast %23 : vector<1x128xi1> to vector<1x128xi1>
    %42 = vector.broadcast %41 : vector<1x128xi1> to vector<8x128xi1>
    %43 = arith.select %42, %39, %40 : vector<8x128xi1>, vector<8x128xbf16>
    %44 = vector.extract_strided_slice %1 {offsets = [0, 16], sizes = [8, 128], strides = [1, 1]} : vector<8x256xbf16> to vector<8x128xbf16>
    %45 = vector.extract_strided_slice %1 {offsets = [0, 19], sizes = [8, 128], strides = [1, 1]} : vector<8x256xbf16> to vector<8x128xbf16>
    %cst_7 = arith.constant 0.000000e+00 : bf16
    %46 = vector.broadcast %cst_7 : bf16 to vector<8x128xbf16>
    %47 = vector.shape_cast %38 : vector<1x128xi1> to vector<1x128xi1>
    %48 = vector.broadcast %47 : vector<1x128xi1> to vector<8x128xi1>
    %49 = arith.select %48, %45, %46 : vector<8x128xi1>, vector<8x128xbf16>
    %50 = vector.extract_strided_slice %1 {offsets = [0, 61], sizes = [8, 128], strides = [1, 1]} : vector<8x256xbf16> to vector<8x128xbf16>
    %cst_8 = arith.constant 0.000000e+00 : bf16
    %51 = vector.broadcast %cst_8 : bf16 to vector<8x128xbf16>
    %52 = vector.shape_cast %23 : vector<1x128xi1> to vector<1x128xi1>
    %53 = vector.broadcast %52 : vector<1x128xi1> to vector<8x128xi1>
    %54 = arith.select %53, %50, %51 : vector<8x128xi1>, vector<8x128xbf16>
    %55 = vector.extract_strided_slice %1 {offsets = [0, 64], sizes = [8, 128], strides = [1, 1]} : vector<8x256xbf16> to vector<8x128xbf16>
    %56 = vector.extract_strided_slice %1 {offsets = [0, 67], sizes = [8, 128], strides = [1, 1]} : vector<8x256xbf16> to vector<8x128xbf16>
    %cst_9 = arith.constant 0.000000e+00 : bf16
    %57 = vector.broadcast %cst_9 : bf16 to vector<8x128xbf16>
    %58 = vector.shape_cast %38 : vector<1x128xi1> to vector<1x128xi1>
    %59 = vector.broadcast %58 : vector<1x128xi1> to vector<8x128xi1>
    %60 = arith.select %59, %56, %57 : vector<8x128xi1>, vector<8x128xbf16>
    %61 = vector.extract_strided_slice %1 {offsets = [0, 109], sizes = [8, 128], strides = [1, 1]} : vector<8x256xbf16> to vector<8x128xbf16>
    %cst_10 = arith.constant 0.000000e+00 : bf16
    %62 = vector.broadcast %cst_10 : bf16 to vector<8x128xbf16>
    %63 = vector.shape_cast %23 : vector<1x128xi1> to vector<1x128xi1>
    %64 = vector.broadcast %63 : vector<1x128xi1> to vector<8x128xi1>
    %65 = arith.select %64, %61, %62 : vector<8x128xi1>, vector<8x128xbf16>
    %66 = vector.extract_strided_slice %1 {offsets = [0, 112], sizes = [8, 128], strides = [1, 1]} : vector<8x256xbf16> to vector<8x128xbf16>
    %67 = vector.extract_strided_slice %1 {offsets = [0, 115], sizes = [8, 128], strides = [1, 1]} : vector<8x256xbf16> to vector<8x128xbf16>
    %cst_11 = arith.constant 0.000000e+00 : bf16
    %68 = vector.broadcast %cst_11 : bf16 to vector<8x128xbf16>
    %69 = vector.shape_cast %38 : vector<1x128xi1> to vector<1x128xi1>
    %70 = vector.broadcast %69 : vector<1x128xi1> to vector<8x128xi1>
    %71 = arith.select %70, %67, %68 : vector<8x128xi1>, vector<8x128xbf16>
    %72 = tpu.concatenate %43, %44, %49, %54, %55, %60, %65, %66, %71 in 0 : vector<8x128xbf16>, vector<8x128xbf16>, vector<8x128xbf16>, vector<8x128xbf16>, vector<8x128xbf16>, vector<8x128xbf16>, vector<8x128xbf16>, vector<8x128xbf16>, vector<8x128xbf16> -> vector<72x128xbf16>
    %73 = vector.extract_strided_slice %1 {offsets = [0, 47], sizes = [8, 128], strides = [1, 1]} : vector<8x256xbf16> to vector<8x128xbf16>
    %cst_12 = arith.constant 0.000000e+00 : bf16
    %74 = vector.broadcast %cst_12 : bf16 to vector<8x128xbf16>
    %75 = vector.shape_cast %28 : vector<1x128xi1> to vector<1x128xi1>
    %76 = vector.broadcast %75 : vector<1x128xi1> to vector<8x128xi1>
    %77 = arith.select %76, %73, %74 : vector<8x128xi1>, vector<8x128xbf16>
    %78 = vector.extract_strided_slice %1 {offsets = [0, 48], sizes = [8, 128], strides = [1, 1]} : vector<8x256xbf16> to vector<8x128xbf16>
    %79 = vector.extract_strided_slice %1 {offsets = [0, 49], sizes = [8, 128], strides = [1, 1]} : vector<8x256xbf16> to vector<8x128xbf16>
    %cst_13 = arith.constant 0.000000e+00 : bf16
    %80 = vector.broadcast %cst_13 : bf16 to vector<8x128xbf16>
    %81 = vector.shape_cast %33 : vector<1x128xi1> to vector<1x128xi1>
    %82 = vector.broadcast %81 : vector<1x128xi1> to vector<8x128xi1>
    %83 = arith.select %82, %79, %80 : vector<8x128xi1>, vector<8x128xbf16>
    %84 = vector.extract_strided_slice %1 {offsets = [0, 63], sizes = [8, 128], strides = [1, 1]} : vector<8x256xbf16> to vector<8x128xbf16>
    %cst_14 = arith.constant 0.000000e+00 : bf16
    %85 = vector.broadcast %cst_14 : bf16 to vector<8x128xbf16>
    %86 = vector.shape_cast %28 : vector<1x128xi1> to vector<1x128xi1>
    %87 = vector.broadcast %86 : vector<1x128xi1> to vector<8x128xi1>
    %88 = arith.select %87, %84, %85 : vector<8x128xi1>, vector<8x128xbf16>
    %89 = vector.extract_strided_slice %1 {offsets = [0, 64], sizes = [8, 128], strides = [1, 1]} : vector<8x256xbf16> to vector<8x128xbf16>
    %90 = vector.extract_strided_slice %1 {offsets = [0, 65], sizes = [8, 128], strides = [1, 1]} : vector<8x256xbf16> to vector<8x128xbf16>
    %cst_15 = arith.constant 0.000000e+00 : bf16
    %91 = vector.broadcast %cst_15 : bf16 to vector<8x128xbf16>
    %92 = vector.shape_cast %33 : vector<1x128xi1> to vector<1x128xi1>
    %93 = vector.broadcast %92 : vector<1x128xi1> to vector<8x128xi1>
    %94 = arith.select %93, %90, %91 : vector<8x128xi1>, vector<8x128xbf16>
    %95 = vector.extract_strided_slice %1 {offsets = [0, 79], sizes = [8, 128], strides = [1, 1]} : vector<8x256xbf16> to vector<8x128xbf16>
    %cst_16 = arith.constant 0.000000e+00 : bf16
    %96 = vector.broadcast %cst_16 : bf16 to vector<8x128xbf16>
    %97 = vector.shape_cast %28 : vector<1x128xi1> to vector<1x128xi1>
    %98 = vector.broadcast %97 : vector<1x128xi1> to vector<8x128xi1>
    %99 = arith.select %98, %95, %96 : vector<8x128xi1>, vector<8x128xbf16>
    %100 = vector.extract_strided_slice %1 {offsets = [0, 80], sizes = [8, 128], strides = [1, 1]} : vector<8x256xbf16> to vector<8x128xbf16>
    %101 = vector.extract_strided_slice %1 {offsets = [0, 81], sizes = [8, 128], strides = [1, 1]} : vector<8x256xbf16> to vector<8x128xbf16>
    %cst_17 = arith.constant 0.000000e+00 : bf16
    %102 = vector.broadcast %cst_17 : bf16 to vector<8x128xbf16>
    %103 = vector.shape_cast %33 : vector<1x128xi1> to vector<1x128xi1>
    %104 = vector.broadcast %103 : vector<1x128xi1> to vector<8x128xi1>
    %105 = arith.select %104, %101, %102 : vector<8x128xi1>, vector<8x128xbf16>
    %106 = tpu.concatenate %77, %78, %83, %88, %89, %94, %99, %100, %105 in 0 : vector<8x128xbf16>, vector<8x128xbf16>, vector<8x128xbf16>, vector<8x128xbf16>, vector<8x128xbf16>, vector<8x128xbf16>, vector<8x128xbf16>, vector<8x128xbf16>, vector<8x128xbf16> -> vector<72x128xbf16>
    %c0_18 = arith.constant 0 : index
    %c0_19 = arith.constant 0 : index
    %107 = vector.load %arg4[%c0_18, %c0_19] : memref<4x72xbf16, #tpu.memory_space<vmem>>, vector<4x72xbf16>
    %cst_20 = arith.constant dense<0.000000e+00> : vector<4x128xf32>
    %108 = tpu.matmul %107, %72, %cst_20 {dimension_numbers = #tpu.dot_dimension_numbers<[1], [0], [0], [1], [0, 0, 1, 1], [], []>} : vector<4x72xbf16>, vector<72x128xbf16>, vector<4x128xf32> -> vector<4x128xf32>
    %c0_21 = arith.constant 0 : index
    %c0_22 = arith.constant 0 : index
    %109 = vector.load %arg6[%c0_21, %c0_22] : memref<4x1xf32, #tpu.memory_space<vmem>>, vector<4x1xf32>
    %110 = vector.broadcast %109 : vector<4x1xf32> to vector<4x128xf32>
    %111 = arith.addf %108, %110 : vector<4x128xf32>
    %c0_23 = arith.constant 0 : index
    %c0_24 = arith.constant 0 : index
    %112 = vector.load %arg5[%c0_23, %c0_24] : memref<4x72xbf16, #tpu.memory_space<vmem>>, vector<4x72xbf16>
    %cst_25 = arith.constant dense<0.000000e+00> : vector<4x128xf32>
    %113 = tpu.matmul %112, %106, %cst_25 {dimension_numbers = #tpu.dot_dimension_numbers<[1], [0], [0], [1], [0, 0, 1, 1], [], []>} : vector<4x72xbf16>, vector<72x128xbf16>, vector<4x128xf32> -> vector<4x128xf32>
    %c0_26 = arith.constant 0 : index
    %c0_27 = arith.constant 0 : index
    %114 = vector.load %arg7[%c0_26, %c0_27] : memref<4x1xf32, #tpu.memory_space<vmem>>, vector<4x1xf32>
    %115 = vector.broadcast %114 : vector<4x1xf32> to vector<4x128xf32>
    %116 = arith.addf %113, %115 : vector<4x128xf32>
    %cst_28 = arith.constant dense<0.000000e+00> : vector<128xf32>
    %117 = vector.multi_reduction <add>, %111, %cst_28 [0] : vector<4x128xf32> to vector<128xf32>
    %118 = vector.shape_cast %117 : vector<128xf32> to vector<1x128xf32>
    %cst_29 = arith.constant dense<0.000000e+00> : vector<128xf32>
    %119 = vector.multi_reduction <add>, %116, %cst_29 [0] : vector<4x128xf32> to vector<128xf32>
    %120 = vector.shape_cast %119 : vector<128xf32> to vector<1x128xf32>
    %121 = arith.addf %118, %120 : vector<1x128xf32>
    %cst_30 = arith.constant 1.250000e-01 : f32
    %122 = vector.broadcast %cst_30 : f32 to vector<1x128xf32>
    %123 = arith.mulf %121, %122 : vector<1x128xf32>
    %cst_31 = arith.constant dense<0xFF800000> : vector<128xf32>
    %124 = vector.multi_reduction <maximumf>, %111, %cst_31 [0] : vector<4x128xf32> to vector<128xf32>
    %125 = vector.shape_cast %124 : vector<128xf32> to vector<1x128xf32>
    %cst_32 = arith.constant dense<0xFF800000> : vector<128xf32>
    %126 = vector.multi_reduction <maximumf>, %116, %cst_32 [0] : vector<4x128xf32> to vector<128xf32>
    %127 = vector.shape_cast %126 : vector<128xf32> to vector<1x128xf32>
    %128 = arith.maximumf %125, %127 : vector<1x128xf32>
    %129 = tpu.concatenate %123, %128 in 0 : vector<1x128xf32>, vector<1x128xf32> -> vector<2x128xf32>
    %130 = vector.shape_cast %129 : vector<2x128xf32> to vector<2x8x16xf32>
    %cst_33 = arith.constant dense<0xFF800000> : vector<2x8xf32>
    %131 = vector.multi_reduction <maximumf>, %130, %cst_33 [2] : vector<2x8x16xf32> to vector<2x8xf32>
    %132 = vector.shape_cast %131 : vector<2x8xf32> to vector<2x8x1xf32>
    %133 = vector.broadcast %132 : vector<2x8x1xf32> to vector<2x8x16xf32>
    %134 = arith.subf %130, %133 : vector<2x8x16xf32>
    %135 = math.exp %134 : vector<2x8x16xf32>
    %cst_34 = arith.constant dense<0.000000e+00> : vector<2x8xf32>
    %136 = vector.multi_reduction <add>, %135, %cst_34 [2] : vector<2x8x16xf32> to vector<2x8xf32>
    %137 = vector.shape_cast %136 : vector<2x8xf32> to vector<2x8x1xf32>
    %138 = tpu.reciprocal %137 {approx = true} : vector<2x8x1xf32> -> vector<2x8x1xf32>
    %139 = vector.broadcast %138 : vector<2x8x1xf32> to vector<2x8x16xf32>
    %140 = arith.mulf %135, %139 : vector<2x8x16xf32>
    %141 = vector.shape_cast %140 : vector<2x8x16xf32> to vector<2x128xf32>
    %142 = vector.extract_strided_slice %141 {offsets = [0, 0], sizes = [1, 128], strides = [1, 1]} : vector<2x128xf32> to vector<1x128xf32>
    %143 = vector.broadcast %142 : vector<1x128xf32> to vector<4x128xf32>
    %144 = arith.mulf %111, %143 : vector<4x128xf32>
    %145 = arith.truncf %144 : vector<4x128xf32> to vector<4x128xbf16>
    %146 = vector.extract_strided_slice %141 {offsets = [1, 0], sizes = [1, 128], strides = [1, 1]} : vector<2x128xf32> to vector<1x128xf32>
    %147 = vector.broadcast %146 : vector<1x128xf32> to vector<4x128xf32>
    %148 = arith.mulf %116, %147 : vector<4x128xf32>
    %149 = arith.truncf %148 : vector<4x128xf32> to vector<4x128xbf16>
    %150 = tpu.concatenate %145, %149 in 0 : vector<4x128xbf16>, vector<4x128xbf16> -> vector<8x128xbf16>
    %c0_35 = arith.constant 0 : index
    %c0_36 = arith.constant 0 : index
    %151 = vector.load %arg8[%c0_35, %c0_36] : memref<8x8xbf16, #tpu.memory_space<vmem>>, vector<8x8xbf16>
    %cst_37 = arith.constant dense<0.000000e+00> : vector<8x128xf32>
    %152 = tpu.matmul %151, %150, %cst_37 {dimension_numbers = #tpu.dot_dimension_numbers<[1], [0], [0], [1], [0, 0, 1, 1], [], []>} : vector<8x8xbf16>, vector<8x128xbf16>, vector<8x128xf32> -> vector<8x128xf32>
    %c0_38 = arith.constant 0 : index
    %c0_39 = arith.constant 0 : index
    %153 = vector.load %arg9[%c0_38, %c0_39] : memref<8x1xf32, #tpu.memory_space<vmem>>, vector<8x1xf32>
    %154 = vector.broadcast %153 : vector<8x1xf32> to vector<8x128xf32>
    %155 = arith.addf %152, %154 : vector<8x128xf32>
    %c0_40 = arith.constant 0 : index
    %c0_41 = arith.constant 0 : index
    %c0_42 = arith.constant 0 : index
    %156 = vector.load %arg3[%c0_40, %c0_41, %c0_42] : memref<1x8x128xf32, #tpu.memory_space<vmem>>, vector<1x8x128xf32>
    %157 = vector.shape_cast %156 : vector<1x8x128xf32> to vector<8x128xf32>
    %158 = arith.mulf %157, %155 : vector<8x128xf32>
    %c0_43 = arith.constant 0 : index
    %c0_44 = arith.constant 0 : index
    %c0_45 = arith.constant 0 : index
    %159 = vector.load %arg10[%c0_43, %c0_44, %c0_45] : memref<1x8x128xf32, #tpu.memory_space<vmem>>, vector<1x8x128xf32>
    %160 = vector.shape_cast %159 : vector<1x8x128xf32> to vector<8x128xf32>
    %161 = vector.shape_cast %158 : vector<8x128xf32> to vector<1x8x128xf32>
    tpu.vector_store %arg10[%c0_43, %c0_44, %c0_45], %161 {strides = array<i32>} : memref<1x8x128xf32, #tpu.memory_space<vmem>>, vector<1x8x128xf32>,
    return
  }
  func.func @transform_0(%arg0: i32, %arg1: i32) -> (i32, i32, i32, i32) {
    %c0_i32 = arith.constant 0 : i32
    %c0_i32_0 = arith.constant 0 : i32
    %c0_i32_1 = arith.constant 0 : i32
    return %arg0, %arg1, %c0_i32, %c0_i32_0 : i32, i32, i32, i32
  }
  func.func @transform_1(%arg0: i32, %arg1: i32) -> (i32, i32, i32) {
    %c0_i32 = arith.constant 0 : i32
    %c0_i32_0 = arith.constant 0 : i32
    return %arg0, %c0_i32, %arg1 : i32, i32, i32
  }
  func.func @transform_2(%arg0: i32, %arg1: i32) -> (i32, i32) {
    %c0_i32 = arith.constant 0 : i32
    %c0_i32_0 = arith.constant 0 : i32
    %c0_i32_1 = arith.constant 0 : i32
    return %c0_i32, %c0_i32_0 : i32, i32
  }
  func.func @transform_3(%arg0: i32, %arg1: i32) -> (i32, i32) {
    %c0_i32 = arith.constant 0 : i32
    %c0_i32_0 = arith.constant 0 : i32
    %c0_i32_1 = arith.constant 0 : i32
    return %c0_i32, %c0_i32_0 : i32, i32
  }
  func.func @transform_4(%arg0: i32, %arg1: i32) -> (i32, i32) {
    %c0_i32 = arith.constant 0 : i32
    %c0_i32_0 = arith.constant 0 : i32
    %c0_i32_1 = arith.constant 0 : i32
    return %c0_i32, %c0_i32_0 : i32, i32
  }
  func.func @transform_5(%arg0: i32, %arg1: i32) -> (i32, i32) {
    %c0_i32 = arith.constant 0 : i32
    %c0_i32_0 = arith.constant 0 : i32
    %c0_i32_1 = arith.constant 0 : i32
    return %c0_i32, %c0_i32_0 : i32, i32
  }
  func.func @transform_6(%arg0: i32, %arg1: i32) -> (i32, i32) {
    %c0_i32 = arith.constant 0 : i32
    %c0_i32_0 = arith.constant 0 : i32
    %c0_i32_1 = arith.constant 0 : i32
    return %c0_i32, %c0_i32_0 : i32, i32
  }
  func.func @transform_7(%arg0: i32, %arg1: i32) -> (i32, i32) {
    %c0_i32 = arith.constant 0 : i32
    %c0_i32_0 = arith.constant 0 : i32
    %c0_i32_1 = arith.constant 0 : i32
    return %c0_i32, %c0_i32_0 : i32, i32
  }
  func.func @transform_8(%arg0: i32, %arg1: i32) -> (i32, i32, i32) {
    %c0_i32 = arith.constant 0 : i32
    %c0_i32_0 = arith.constant 0 : i32
    return %arg0, %c0_i32, %arg1 : i32, i32, i32
  }
}

</mosaic_0001>

<llo_original>
// kernel: tc_forward.1
$region0: #{tc_forward.1}
  #allocation0 [shape = 'u32[]', space=smem, size = 0x4, offset = 0x4, fixed_abs, tag = 'smem constant byte address 0x4 - core index']
  #allocation1 [shape = 'u32[144,128]{1,0:T(1,128)}', space=vmem, size = 0x12000, scoped, tag = 'internal scratch']
  %s0 = inlined_call_operand.vmem [shape: bf16[2,2,8,256], index: 0, kind: input, shape index: {}]
  %s1 = inlined_call_operand.vmem [shape: f32[2,8,256], index: 1, kind: input, shape index: {}]
  %s2 = inlined_call_operand.vmem [shape: bf16[4,72], index: 2, kind: input, shape index: {}]
  %s3 = inlined_call_operand.vmem [shape: bf16[4,72], index: 3, kind: input, shape index: {}]
  %s4 = inlined_call_operand.vmem [shape: f32[4,1], index: 4, kind: input, shape index: {}]
  %s5 = inlined_call_operand.vmem [shape: f32[4,1], index: 5, kind: input, shape index: {}]
  %s6 = inlined_call_operand.vmem [shape: bf16[8,8], index: 6, kind: input, shape index: {}]
  %s7 = inlined_call_operand.vmem [shape: f32[8,1], index: 7, kind: input, shape index: {}]
  %s8 = inlined_call_operand.vmem [shape: f32[2,8,256], index: 8, kind: output, shape index: {}]
  %s9 = sld [smem:[#allocation0]]
  $region65: #{tc_forward.1} parent=0
    _
  %s11 = ssub.s32 1, %s9
  %s12 = scalar_select 0, %s11, %s9
  loop: start=0, step=1, limit=6
  $region2: #{tc_forward.1} parent=0 // loop_pre_header
    _
  $region3: #{tc_forward.1} parent=0 // loop_header
    %s14 = sphi 0, %s18
    %p15 = scmp.ge.s32.totalorder %s14, 6
    %s21 = sphi 0, %s33
    %s22 = sphi 0, %s29
    %s23 = sphi 0, %s21
    %s24 = sphi 0, %s22
    %s25 = sphi 0, %s23
    %s26 = sphi 0, %s24
    %s38 = sphi 0, %s40
    %s41 = sphi 0, %s38
    %s42 = sphi 0, %s41
    %s58 = sphi 0, %s42
    %s66 = sphi 0, %s68
    %s69 = sphi 0, %s66
    %s70 = sphi 0, %s69
    %s86 = sphi 0, %s70
    %s90 = sphi 0, %s90
    %s92 = sphi 0, %s90
    %s93 = sphi 0, %s92
    %s107 = sphi 0, %s93
    %s111 = sphi 0, %s111
    %s113 = sphi 0, %s111
    %s114 = sphi 0, %s113
    %s128 = sphi 0, %s114
    %s132 = sphi 0, %s132
    %s134 = sphi 0, %s132
    %s135 = sphi 0, %s134
    %s149 = sphi 0, %s135
    %s153 = sphi 0, %s153
    %s155 = sphi 0, %s153
    %s156 = sphi 0, %s155
    %s170 = sphi 0, %s156
    %s174 = sphi 0, %s174
    %s176 = sphi 0, %s174
    %s177 = sphi 0, %s176
    %s191 = sphi 0, %s177
    %s195 = sphi 0, %s195
    %s197 = sphi 0, %s195
    %s198 = sphi 0, %s197
    %s212 = sphi 0, %s198
    %s220 = sphi 0, %s222
    %s223 = sphi 0, %s220
    %s224 = sphi 0, %s223
    %s240 = sphi 0, %s224
  $region4: #{tc_forward.1} parent=0 // loop_header_branch
    %17 = sbr.rel (%p15) target = $region8
  $region5: #{tc_forward.1} parent=0 // loop_body
    %s19 = ssub.s32 %s14, 1
    %s20 = ssub.s32 %s14, 2
    %s27 = sadd.s32 1, %s22
    %p28 = scmp.ge.s32.totalorder %s27, 2
    %s29 = scalar_select %p28, 0, %s27
    %s30 = sadd.s32 1, %s21
    %s31 = scalar_select %p28, %s30, %s21
    %p32 = scmp.ge.s32.totalorder %s31, 2
    %s33 = scalar_select %p32, 0, %s31
    %s34 = ssub.s32 %s21, %s33
    %s35 = ssub.s32 %s22, %s29
    %s36 = sor.u32 %s34, %s35
    %p37 = scmp.eq.s32.totalorder %s36, 0
    %s39 = sadd.s32 %s38, 1
    %s40 = scalar_select %p37, %s38, %s39
    %p43 = pneg %p37
    %p44 = scmp.eq.s32.totalorder %s14, 3
    %p45 = por %p43, %p44
    %p46 = scmp.ne.s32.totalorder %s38, %s41
    %p47 = scmp.eq.s32.totalorder %s14, 0
    %p48 = por %p46, %p47
    %p49 = scmp.ne.s32.totalorder %s38, %s41
    %p50 = scmp.eq.s32.totalorder %s19, 3
    %p51 = por %p49, %p50
    %p52 = scmp.ne.s32.totalorder %s41, %s42
    %p53 = scmp.eq.s32.totalorder %s19, 0
    %p54 = por %p52, %p53
    %p55 = scmp.ne.s32.totalorder %s41, %s42
    %p56 = scmp.eq.s32.totalorder %s20, 3
    %p57 = por %p55, %p56
    %p59 = scmp.ne.s32.totalorder %s42, %s58
    %p60 = scmp.eq.s32.totalorder %s20, 0
    %p61 = por %p59, %p60
    %s62 = ssub.s32 %s21, %s33
    %s63 = ssub.s32 %s22, %s29
    %s64 = sor.u32 %s62, %s63
    %p65 = scmp.eq.s32.totalorder %s64, 0
    %s67 = sadd.s32 %s66, 1
    %s68 = scalar_select %p65, %s66, %s67
    %p71 = pneg %p65
    %p72 = scmp.eq.s32.totalorder %s14, 3
    %p73 = por %p71, %p72
    %p74 = scmp.ne.s32.totalorder %s66, %s69
    %p75 = scmp.eq.s32.totalorder %s14, 0
    %p76 = por %p74, %p75
    %p77 = scmp.ne.s32.totalorder %s66, %s69
    %p78 = scmp.eq.s32.totalorder %s19, 3
    %p79 = por %p77, %p78
    %p80 = scmp.ne.s32.totalorder %s69, %s70
    %p81 = scmp.eq.s32.totalorder %s19, 0
    %p82 = por %p80, %p81
    %p83 = scmp.ne.s32.totalorder %s69, %s70
    %p84 = scmp.eq.s32.totalorder %s20, 3
    %p85 = por %p83, %p84
    %p87 = scmp.ne.s32.totalorder %s70, %s86
    %p88 = scmp.eq.s32.totalorder %s20, 0
    %p89 = por %p87, %p88
    %s91 = sadd.s32 %s90, 1
    %p94 = scmp.eq.s32.totalorder %s14, 3
    %p95 = scmp.ne.s32.totalorder %s90, %s92
    %p96 = scmp.eq.s32.totalorder %s14, 0
    %p97 = por %p95, %p96
    %p98 = scmp.ne.s32.totalorder %s90, %s92
    %p99 = scmp.eq.s32.totalorder %s19, 3
    %p100 = por %p98, %p99
    %p101 = scmp.ne.s32.totalorder %s92, %s93
    %p102 = scmp.eq.s32.totalorder %s19, 0
    %p103 = por %p101, %p102
    %p104 = scmp.ne.s32.totalorder %s92, %s93
    %p105 = scmp.eq.s32.totalorder %s20, 3
    %p106 = por %p104, %p105
    %p108 = scmp.ne.s32.totalorder %s93, %s107
    %p109 = scmp.eq.s32.totalorder %s20, 0
    %p110 = por %p108, %p109
    %s112 = sadd.s32 %s111, 1
    %p115 = scmp.eq.s32.totalorder %s14, 3
    %p116 = scmp.ne.s32.totalorder %s111, %s113
    %p117 = scmp.eq.s32.totalorder %s14, 0
    %p118 = por %p116, %p117
    %p119 = scmp.ne.s32.totalorder %s111, %s113
    %p120 = scmp.eq.s32.totalorder %s19, 3
    %p121 = por %p119, %p120
    %p122 = scmp.ne.s32.totalorder %s113, %s114
    %p123 = scmp.eq.s32.totalorder %s19, 0
    %p124 = por %p122, %p123
    %p125 = scmp.ne.s32.totalorder %s113, %s114
    %p126 = scmp.eq.s32.totalorder %s20, 3
    %p127 = por %p125, %p126
    %p129 = scmp.ne.s32.totalorder %s114, %s128
    %p130 = scmp.eq.s32.totalorder %s20, 0
    %p131 = por %p129, %p130
    %s133 = sadd.s32 %s132, 1
    %p136 = scmp.eq.s32.totalorder %s14, 3
    %p137 = scmp.ne.s32.totalorder %s132, %s134
    %p138 = scmp.eq.s32.totalorder %s14, 0
    %p139 = por %p137, %p138
    %p140 = scmp.ne.s32.totalorder %s132, %s134
    %p141 = scmp.eq.s32.totalorder %s19, 3
    %p142 = por %p140, %p141
    %p143 = scmp.ne.s32.totalorder %s134, %s135
    %p144 = scmp.eq.s32.totalorder %s19, 0
    %p145 = por %p143, %p144
    %p146 = scmp.ne.s32.totalorder %s134, %s135
    %p147 = scmp.eq.s32.totalorder %s20, 3
    %p148 = por %p146, %p147
    %p150 = scmp.ne.s32.totalorder %s135, %s149
    %p151 = scmp.eq.s32.totalorder %s20, 0
    %p152 = por %p150, %p151
    %s154 = sadd.s32 %s153, 1
    %p157 = scmp.eq.s32.totalorder %s14, 3
    %p158 = scmp.ne.s32.totalorder %s153, %s155
    %p159 = scmp.eq.s32.totalorder %s14, 0
    %p160 = por %p158, %p159
    %p161 = scmp.ne.s32.totalorder %s153, %s155
    %p162 = scmp.eq.s32.totalorder %s19, 3
    %p163 = por %p161, %p162
    %p164 = scmp.ne.s32.totalorder %s155, %s156
    %p165 = scmp.eq.s32.totalorder %s19, 0
    %p166 = por %p164, %p165
    %p167 = scmp.ne.s32.totalorder %s155, %s156
    %p168 = scmp.eq.s32.totalorder %s20, 3
    %p169 = por %p167, %p168
    %p171 = scmp.ne.s32.totalorder %s156, %s170
    %p172 = scmp.eq.s32.totalorder %s20, 0
    %p173 = por %p171, %p172
    %s175 = sadd.s32 %s174, 1
    %p178 = scmp.eq.s32.totalorder %s14, 3
    %p179 = scmp.ne.s32.totalorder %s174, %s176
    %p180 = scmp.eq.s32.totalorder %s14, 0
    %p181 = por %p179, %p180
    %p182 = scmp.ne.s32.totalorder %s174, %s176
    %p183 = scmp.eq.s32.totalorder %s19, 3
    %p184 = por %p182, %p183
    %p185 = scmp.ne.s32.totalorder %s176, %s177
    %p186 = scmp.eq.s32.totalorder %s19, 0
    %p187 = por %p185, %p186
    %p188 = scmp.ne.s32.totalorder %s176, %s177
    %p189 = scmp.eq.s32.totalorder %s20, 3
    %p190 = por %p188, %p189
    %p192 = scmp.ne.s32.totalorder %s177, %s191
    %p193 = scmp.eq.s32.totalorder %s20, 0
    %p194 = por %p192, %p193
    %s196 = sadd.s32 %s195, 1
    %p199 = scmp.eq.s32.totalorder %s14, 3
    %p200 = scmp.ne.s32.totalorder %s195, %s197
    %p201 = scmp.eq.s32.totalorder %s14, 0
    %p202 = por %p200, %p201
    %p203 = scmp.ne.s32.totalorder %s195, %s197
    %p204 = scmp.eq.s32.totalorder %s19, 3
    %p205 = por %p203, %p204
    %p206 = scmp.ne.s32.totalorder %s197, %s198
    %p207 = scmp.eq.s32.totalorder %s19, 0
    %p208 = por %p206, %p207
    %p209 = scmp.ne.s32.totalorder %s197, %s198
    %p210 = scmp.eq.s32.totalorder %s20, 3
    %p211 = por %p209, %p210
    %p213 = scmp.ne.s32.totalorder %s198, %s212
    %p214 = scmp.eq.s32.totalorder %s20, 0
    %p215 = por %p213, %p214
    %s216 = ssub.s32 %s21, %s33
    %s217 = ssub.s32 %s22, %s29
    %s218 = sor.u32 %s216, %s217
    %p219 = scmp.eq.s32.totalorder %s218, 0
    %s221 = sadd.s32 %s220, 1
    %s222 = scalar_select %p219, %s220, %s221
    %p225 = pneg %p219
    %p226 = scmp.eq.s32.totalorder %s14, 3
    %p227 = por %p225, %p226
    %p228 = scmp.ne.s32.totalorder %s220, %s223
    %p229 = scmp.eq.s32.totalorder %s14, 0
    %p230 = por %p228, %p229
    %p231 = scmp.ne.s32.totalorder %s220, %s223
    %p232 = scmp.eq.s32.totalorder %s19, 3
    %p233 = por %p231, %p232
    %p234 = scmp.ne.s32.totalorder %s223, %s224
    %p235 = scmp.eq.s32.totalorder %s19, 0
    %p236 = por %p234, %p235
    %p237 = scmp.ne.s32.totalorder %s223, %s224
    %p238 = scmp.eq.s32.totalorder %s20, 3
    %p239 = por %p237, %p238
    %p241 = scmp.ne.s32.totalorder %s224, %s240
    %p242 = scmp.eq.s32.totalorder %s20, 0
    %p243 = por %p241, %p242
    %p244 = scmp.le.s32.totalorder 1, %s14
    %p245 = scmp.lt.s32.totalorder %s14, 5
    %p246 = pnand %p244, %p245
    %p247 = pneg %p246
    // Predicated region
    $region9: #{tc_forward.1} parent=5 // pred_check
      _
    $region10: #{tc_forward.1} parent=5 // pred_check_branch
      %249 = sbr.rel (%p246) target = $region12
    $region11: #{tc_forward.1} parent=5 // pred_region
      %s250 = ssub.s32 %s14, 1
      // Predicated region
      $region13: #{tc_forward.1} parent=11 // pred_check
        %p251 = pneg %p103
      $region14: #{tc_forward.1} parent=11 // pred_check_branch
        %253 = sbr.rel (%p251) target = $region16
      $region15: #{tc_forward.1} parent=11 // pred_region
        _
      $region16: #{tc_forward.1} parent=11 // pred_fallthru
        _
      // Predicated region
      $region17: #{tc_forward.1} parent=11 // pred_check
        %p254 = pneg %p124
      $region18: #{tc_forward.1} parent=11 // pred_check_branch
        %256 = sbr.rel (%p254) target = $region20
      $region19: #{tc_forward.1} parent=11 // pred_region
        _
      $region20: #{tc_forward.1} parent=11 // pred_fallthru
        _
      // Predicated region
      $region21: #{tc_forward.1} parent=11 // pred_check
        %p257 = pneg %p145
      $region22: #{tc_forward.1} parent=11 // pred_check_branch
        %259 = sbr.rel (%p257) target = $region24
      $region23: #{tc_forward.1} parent=11 // pred_region
        _
      $region24: #{tc_forward.1} parent=11 // pred_fallthru
        _
      // Predicated region
      $region25: #{tc_forward.1} parent=11 // pred_check
        %p260 = pneg %p166
      $region26: #{tc_forward.1} parent=11 // pred_check_branch
        %262 = sbr.rel (%p260) target = $region28
      $region27: #{tc_forward.1} parent=11 // pred_region
        _
      $region28: #{tc_forward.1} parent=11 // pred_fallthru
        _
      // Predicated region
      $region29: #{tc_forward.1} parent=11 // pred_check
        %p263 = pneg %p187
      $region30: #{tc_forward.1} parent=11 // pred_check_branch
        %265 = sbr.rel (%p263) target = $region32
      $region31: #{tc_forward.1} parent=11 // pred_region
        _
      $region32: #{tc_forward.1} parent=11 // pred_fallthru
        _
      // Predicated region
      $region33: #{tc_forward.1} parent=11 // pred_check
        %p266 = pneg %p208
      $region34: #{tc_forward.1} parent=11 // pred_check_branch
        %268 = sbr.rel (%p266) target = $region36
      $region35: #{tc_forward.1} parent=11 // pred_region
        _
      $region36: #{tc_forward.1} parent=11 // pred_fallthru
        _
    $region12: #{tc_forward.1} parent=5 // pred_fallthru
      _
    %p269 = scmp.lt.s32.totalorder %s14, 4
    // Predicated region
    $region37: #{tc_forward.1} parent=5 // pred_check
      %p270 = pneg %p269
    $region38: #{tc_forward.1} parent=5 // pred_check_branch
      %272 = sbr.rel (%p270) target = $region40
    $region39: #{tc_forward.1} parent=5 // pred_region
      // Predicated region
      $region41: #{tc_forward.1} parent=39 // pred_check
        %p273 = pneg %p48
      $region42: #{tc_forward.1} parent=39 // pred_check_branch
        %275 = sbr.rel (%p273) target = $region44
      $region43: #{tc_forward.1} parent=39 // pred_region
        %p276 = scmp.lt.s32.totalorder %s21, 1
        %s277 = scalar_select %p276, %s21, 1
        %p278 = scmp.lt.s32.totalorder %s22, 1
        %s279 = scalar_select %p278, %s22, 1
        %s280 = smul.addr %s279, 2
        %s281 = smul.addr %s277, 4
        %s282 = sadd.s32 %s280, %s281
        %s283 = smul.addr %s282, 4
        %s284 = scalar_lea.vmem %s0, %s283
      $region44: #{tc_forward.1} parent=39 // pred_fallthru
        _
      // Predicated region
      $region45: #{tc_forward.1} parent=39 // pred_check
        %p285 = pneg %p76
      $region46: #{tc_forward.1} parent=39 // pred_check_branch
        %287 = sbr.rel (%p285) target = $region48
      $region47: #{tc_forward.1} parent=39 // pred_region
        %p288 = scmp.lt.s32.totalorder %s21, 1
        %s289 = scalar_select %p288, %s21, 1
        %p290 = scmp.lt.s32.totalorder %s22, 1
        %s291 = scalar_select %p290, %s22, 1
        %s292 = smul.addr %s289, 2
        %s293 = sadd.s32 %s291, %s292
        %s294 = smul.addr %s293, 8
        %s295 = scalar_lea.vmem %s1, %s294
      $region48: #{tc_forward.1} parent=39 // pred_fallthru
        _
    $region40: #{tc_forward.1} parent=5 // pred_fallthru
      _
    %p296 = scmp.le.s32.totalorder 1, %s14
    %p297 = scmp.lt.s32.totalorder %s14, 5
    %p298 = pnand %p296, %p297
    %p299 = pneg %p298
    // Predicated region
    $region49: #{tc_forward.1} parent=5 // pred_check
      _
    $region50: #{tc_forward.1} parent=5 // pred_check_branch
      %301 = sbr.rel (%p298) target = $region52
    $region51: #{tc_forward.1} parent=5 // pred_region
      %s302 = ssub.s32 %s14, 1
      %p303 = scmp.lt.s32.totalorder %s23, 1
      %s304 = scalar_select %p303, %s23, 1
      %p305 = scmp.lt.s32.totalorder %s24, 1
      %s306 = scalar_select %p305, %s24, 1
      %s307 = smul.addr %s306, 2
      %s308 = smul.addr %s304, 4
      %s309 = sadd.s32 %s307, %s308
      %s310 = smul.addr %s309, 4
      %s311 = scalar_lea.vmem %s0, %s310
      %p312 = pneg %p54
      %p313 = pneg %p51
      %p314 = scmp.lt.s32.totalorder %s23, 1
      %s315 = scalar_select %p314, %s23, 1
      %p316 = scmp.lt.s32.totalorder %s24, 1
      %s317 = scalar_select %p316, %s24, 1
      %s318 = smul.addr %s315, 2
      %s319 = sadd.s32 %s317, %s318
      %s320 = smul.addr %s319, 8
      %s321 = scalar_lea.vmem %s1, %s320
      %p322 = pneg %p82
      %p323 = pneg %p79
      %p324 = pneg %p103
      %p325 = pneg %p100
      %p326 = pneg %p124
      %p327 = pneg %p121
      %p328 = pneg %p145
      %p329 = pneg %p142
      %p330 = pneg %p166
      %p331 = pneg %p163
      %p332 = pneg %p187
      %p333 = pneg %p184
      %p334 = pneg %p208
      %p335 = pneg %p205
      %p336 = pneg %p236
      %p337 = pneg %p233
      %p338 = scmp.lt.s32.totalorder %s23, 1
      %s339 = scalar_select %p338, %s23, 1
      %p340 = scmp.lt.s32.totalorder %s24, 1
      %s341 = scalar_select %p340, %s24, 1
      %s342 = smul.addr %s339, 2
      %s343 = sadd.s32 %s341, %s342
      %s344 = smul.addr %s343, 8
      %s345 = scalar_lea.vmem %s8, %s344
      %p346 = scmp.lt.s32.totalorder %s23, 1
      %s347 = scalar_select %p346, %s23, 1
      %p348 = scmp.lt.s32.totalorder %s24, 1
      %s349 = scalar_select %p348, %s24, 1
      %s350 = smul.addr %s349, 2
      %s351 = smul.addr %s347, 4
      %s352 = sadd.s32 %s350, %s351
      %s353 = smul.addr %s352, 4
      %s354 = scalar_lea.vmem %s0, %s353
      %p355 = scmp.lt.s32.totalorder %s23, 1
      %s356 = scalar_select %p355, %s23, 1
      %p357 = scmp.lt.s32.totalorder %s24, 1
      %s358 = scalar_select %p357, %s24, 1
      %s359 = smul.addr %s356, 2
      %s360 = sadd.s32 %s358, %s359
      %s361 = smul.addr %s360, 8
      %s362 = scalar_lea.vmem %s1, %s361
      %p363 = scmp.lt.s32.totalorder %s23, 1
      %s364 = scalar_select %p363, %s23, 1
      %p365 = scmp.lt.s32.totalorder %s24, 1
      %s366 = scalar_select %p365, %s24, 1
      %s367 = smul.addr %s364, 2
      %s368 = sadd.s32 %s366, %s367
      %s369 = smul.addr %s368, 8
      %s370 = scalar_lea.vmem %s8, %s369
      %v374 = vld [vmem:[%s354] sm:$0xff]
      %v375 = vlaneseq
      %v376 = vand.u32 %v375, 127
      %vm377 = vcmp.lt.s32.totalorder %v376, 0
      %v378 = vsub.s32 0, %v376
      %v379 = vsel %vm377, %v378, %v376
      %v380 = vshrl.u32 %v379, 4
      %v381 = vand.u32 %v379, 15
      %v382 = vsub.s32 0, %v381
      %v383 = vsel %vm377, %v382, %v381
      %vm384 = vcmp.ne.s32.totalorder %v383, 0
      %vm385 = vcmp.lt.s32.totalorder %v383, 0
      %vm386 = vmand %vm385, %vm384
      %v387 = vadd.s32 %v383, 16
      %v388 = vsel %vm386, %v387, %v383
      %vm389 = vcmp.ge.s32.totalorder %v388, 3
      %vm390 = vcmp.lt.s32.totalorder %v388, 19
      %vm391 = vmand %vm389, %vm390
      %vm392 = vcmp.ge.s32.totalorder %v388, 1
      %vm393 = vcmp.lt.s32.totalorder %v388, 17
      %vm394 = vmand %vm392, %vm393
      %vm395 = vcmp.ge.s32.totalorder %v388, 4294967295
      %vm396 = vcmp.lt.s32.totalorder %v388, 15
      %vm397 = vmand %vm395, %vm396
      %vm398 = vcmp.ge.s32.totalorder %v388, 4294967293
      %vm399 = vcmp.lt.s32.totalorder %v388, 13
      %vm400 = vmand %vm398, %vm399
      %v401 = vsel %vm391, 1, 0
      %vm402 = vcmp.eq.s32.totalorder %v401, 1
      %vm403 = vmpackc.low %vm402, %vm402
      %v404 = vsel %vm403, 65537, 0
      %405 = vrot.lane.b32.xlu0 %v404, 13
      %v406 = vpop.permute.xlu0 %405
      %v407 = vrot.slane %v406, 4
      %vm408 = vcmask 105472
      %v409 = vsel %vm408, %v407, %v406
      %vm410 = vcmp.ne.s16.totalorder %v409, 0
      %v411 = vsel %vm410, %v374, 0
      %v412 = vsel %vm400, 1, 0
      %vm413 = vcmp.eq.s32.totalorder %v412, 1
      %vm414 = vmpackc.low %vm413, %vm413
      %v415 = vsel %vm414, 65537, 0
      %416 = vrot.lane.b32.xlu0 %v415, 19
      %v417 = vpop.permute.xlu0 %416
      %v418 = vrot.slane %v417, 4
      %vm419 = vcmask 154624
      %v420 = vsel %vm419, %v418, %v417
      %vm421 = vcmp.ne.s16.totalorder %v420, 0
      %v422 = vsel %vm421, %v374, 0
      %423 = vrot.lane.b32.xlu0 %v404, 61
      %v424 = vpop.permute.xlu0 %423
      %v425 = vrot.slane %v424, 4
      %vm426 = vcmask 498688
      %v427 = vsel %vm426, %v425, %v424
      %vm428 = vcmp.ne.s16.totalorder %v427, 0
      %v429 = vsel %vm428, %v374, 0
      %430 = vrot.lane.b32.xlu0 %v415, 67
      %v431 = vpop.permute.xlu0 %430
      %v432 = vrot.slane %v431, 4
      %vm433 = vcmask 547840
      %v434 = vsel %vm433, %v432, %v431
      %vm435 = vcmp.ne.s16.totalorder %v434, 0
      %v436 = vsel %vm435, %v374, 0
      %437 = vrot.lane.b32.xlu0 %v404, 109
      %v438 = vpop.permute.xlu0 %437
      %v439 = vrot.slane %v438, 4
      %vm440 = vcmask 891904
      %v441 = vsel %vm440, %v439, %v438
      %vm442 = vcmp.ne.s16.totalorder %v441, 0
      %v443 = vsel %vm442, %v374, 0
      %444 = vrot.lane.b32.xlu0 %v415, 115
      %v445 = vpop.permute.xlu0 %444
      %v446 = vrot.slane %v445, 4
      %vm447 = vcmask 941056
      %v448 = vsel %vm447, %v446, %v445
      %vm449 = vcmp.ne.s16.totalorder %v448, 0
      %v450 = vsel %vm449, %v374, 0
      %v452 = vunpack.c.l.b16 %v411
      %v453 = vunpack.c.h.b16 %v411
      %v454 = vpack.c.b16 %v452, %v452
      %v455 = vpack.c.b16 %v453, %v453
      %v457 = vunpack.c.l.b16 %v374
      %v458 = vunpack.c.h.b16 %v374
      %v459 = vpack.c.b16 %v457, %v457
      %v460 = vpack.c.b16 %v458, %v458
      %461 = vrot.lane.b32.xlu0 %v459, 125
      %v462 = vpop.permute.xlu0 %461
      %463 = vrot.lane.b32.xlu0 %v460, 125
      %v464 = vpop.permute.xlu0 %463
      %vm465 = vcmask 1022976
      %v466 = vsel %vm465, %v462, %v464
      %v468 = vunpack.c.l.b16 %v422
      %v469 = vunpack.c.h.b16 %v422
      %v470 = vpack.c.b16 %v468, %v468
      %v471 = vpack.c.b16 %v469, %v469
      %472 = vrot.lane.b32.xlu0 %v470, 122
      %v473 = vpop.permute.xlu0 %472
      %474 = vrot.lane.b32.xlu0 %v471, 122
      %v475 = vpop.permute.xlu0 %474
      %vm476 = vcmask 998400
      %v477 = vsel %vm476, %v473, %v475
      %v479 = vunpack.c.l.b16 %v429
      %v480 = vunpack.c.h.b16 %v429
      %v481 = vpack.c.b16 %v479, %v479
      %v482 = vpack.c.b16 %v480, %v480
      %483 = vrot.lane.b32.xlu0 %v481, 80
      %v484 = vpop.permute.xlu0 %483
      %485 = vrot.lane.b32.xlu0 %v482, 80
      %v486 = vpop.permute.xlu0 %485
      %vm487 = vcmask 654336
      %v488 = vsel %vm487, %v484, %v486
      %489 = vrot.lane.b32.xlu0 %v459, 77
      %v490 = vpop.permute.xlu0 %489
      %491 = vrot.lane.b32.xlu0 %v460, 77
      %v492 = vpop.permute.xlu0 %491
      %vm493 = vcmask 629760
      %v494 = vsel %vm493, %v490, %v492
      %v496 = vunpack.c.l.b16 %v436
      %v497 = vunpack.c.h.b16 %v436
      %v498 = vpack.c.b16 %v496, %v496
      %v499 = vpack.c.b16 %v497, %v497
      %500 = vrot.lane.b32.xlu0 %v498, 74
      %v501 = vpop.permute.xlu0 %500
      %502 = vrot.lane.b32.xlu0 %v499, 74
      %v503 = vpop.permute.xlu0 %502
      %vm504 = vcmask 605184
      %v505 = vsel %vm504, %v501, %v503
      %v507 = vunpack.c.l.b16 %v443
      %v508 = vunpack.c.h.b16 %v443
      %v509 = vpack.c.b16 %v507, %v507
      %v510 = vpack.c.b16 %v508, %v508
      %511 = vrot.lane.b32.xlu0 %v509, 32
      %v512 = vpop.permute.xlu0 %511
      %513 = vrot.lane.b32.xlu0 %v510, 32
      %v514 = vpop.permute.xlu0 %513
      %vm515 = vcmask 261120
      %v516 = vsel %vm515, %v512, %v514
      %517 = vrot.lane.b32.xlu0 %v459, 29
      %v518 = vpop.permute.xlu0 %517
      %519 = vrot.lane.b32.xlu0 %v460, 29
      %v520 = vpop.permute.xlu0 %519
      %vm521 = vcmask 236544
      %v522 = vsel %vm521, %v518, %v520
      %v524 = vunpack.c.l.b16 %v450
      %v525 = vunpack.c.h.b16 %v450
      %v526 = vpack.c.b16 %v524, %v524
      %v527 = vpack.c.b16 %v525, %v525
      %528 = vrot.lane.b32.xlu0 %v526, 26
      %v529 = vpop.permute.xlu0 %528
      %530 = vrot.lane.b32.xlu0 %v527, 26
      %v531 = vpop.permute.xlu0 %530
      %vm532 = vcmask 211968
      %v533 = vsel %vm532, %v529, %v531
      %vm534 = vcmask 1043456
      %v537 = vsel %vm534, %v454, %v466
      %v540 = vsel %vm534, %v455, %v464
      %v543 = vsel %vm534, %v477, %v488
      %v546 = vsel %vm534, %v475, %v486
      %v549 = vsel %vm534, %v494, %v505
      %v552 = vsel %vm534, %v492, %v503
      %v555 = vsel %vm534, %v516, %v522
      %v558 = vsel %vm534, %v514, %v520
      %v559 = vsel %vm394, 1, 0
      %vm560 = vcmp.eq.s32.totalorder %v559, 1
      %vm561 = vmpackc.low %vm560, %vm560
      %v562 = vsel %vm561, 65537, 0
      %563 = vrot.lane.b32.xlu0 %v562, 47
      %v564 = vpop.permute.xlu0 %563
      %v565 = vrot.slane %v564, 4
      %vm566 = vcmask 384000
      %v567 = vsel %vm566, %v565, %v564
      %vm568 = vcmp.ne.s16.totalorder %v567, 0
      %v569 = vsel %vm568, %v374, 0
      %v570 = vsel %vm397, 1, 0
      %vm571 = vcmp.eq.s32.totalorder %v570, 1
      %vm572 = vmpackc.low %vm571, %vm571
      %v573 = vsel %vm572, 65537, 0
      %574 = vrot.lane.b32.xlu0 %v573, 49
      %v575 = vpop.permute.xlu0 %574
      %v576 = vrot.slane %v575, 4
      %vm577 = vcmask 400384
      %v578 = vsel %vm577, %v576, %v575
      %vm579 = vcmp.ne.s16.totalorder %v578, 0
      %v580 = vsel %vm579, %v374, 0
      %581 = vrot.lane.b32.xlu0 %v562, 63
      %v582 = vpop.permute.xlu0 %581
      %v583 = vrot.slane %v582, 4
      %vm584 = vcmask 515072
      %v585 = vsel %vm584, %v583, %v582
      %vm586 = vcmp.ne.s16.totalorder %v585, 0
      %v587 = vsel %vm586, %v374, 0
      %588 = vrot.lane.b32.xlu0 %v573, 65
      %v589 = vpop.permute.xlu0 %588
      %v590 = vrot.slane %v589, 4
      %vm591 = vcmask 531456
      %v592 = vsel %vm591, %v590, %v589
      %vm593 = vcmp.ne.s16.totalorder %v592, 0
      %v594 = vsel %vm593, %v374, 0
      %595 = vrot.lane.b32.xlu0 %v562, 79
      %v596 = vpop.permute.xlu0 %595
      %v597 = vrot.slane %v596, 4
      %vm598 = vcmask 646144
      %v599 = vsel %vm598, %v597, %v596
      %vm600 = vcmp.ne.s16.totalorder %v599, 0
      %v601 = vsel %vm600, %v374, 0
      %602 = vrot.lane.b32.xlu0 %v573, 81
      %v603 = vpop.permute.xlu0 %602
      %v604 = vrot.slane %v603, 4
      %vm605 = vcmask 662528
      %v606 = vsel %vm605, %v604, %v603
      %vm607 = vcmp.ne.s16.totalorder %v606, 0
      %v608 = vsel %vm607, %v374, 0
      %v610 = vunpack.c.l.b16 %v569
      %v611 = vunpack.c.h.b16 %v569
      %v612 = vpack.c.b16 %v610, %v610
      %v613 = vpack.c.b16 %v611, %v611
      %614 = vrot.lane.b32.xlu0 %v459, 127
      %v615 = vpop.permute.xlu0 %614
      %616 = vrot.lane.b32.xlu0 %v460, 127
      %v617 = vpop.permute.xlu0 %616
      %vm618 = vcmask 1039360
      %v619 = vsel %vm618, %v615, %v617
      %v621 = vunpack.c.l.b16 %v580
      %v622 = vunpack.c.h.b16 %v580
      %v623 = vpack.c.b16 %v621, %v621
      %v624 = vpack.c.b16 %v622, %v622
      %625 = vrot.lane.b32.xlu0 %v623, 126
      %v626 = vpop.permute.xlu0 %625
      %627 = vrot.lane.b32.xlu0 %v624, 126
      %v628 = vpop.permute.xlu0 %627
      %vm629 = vcmask 1031168
      %v630 = vsel %vm629, %v626, %v628
      %v632 = vunpack.c.l.b16 %v587
      %v633 = vunpack.c.h.b16 %v587
      %v634 = vpack.c.b16 %v632, %v632
      %v635 = vpack.c.b16 %v633, %v633
      %636 = vrot.lane.b32.xlu0 %v634, 112
      %v637 = vpop.permute.xlu0 %636
      %638 = vrot.lane.b32.xlu0 %v635, 112
      %v639 = vpop.permute.xlu0 %638
      %vm640 = vcmask 916480
      %v641 = vsel %vm640, %v637, %v639
      %642 = vrot.lane.b32.xlu0 %v459, 111
      %v643 = vpop.permute.xlu0 %642
      %644 = vrot.lane.b32.xlu0 %v460, 111
      %v645 = vpop.permute.xlu0 %644
      %vm646 = vcmask 908288
      %v647 = vsel %vm646, %v643, %v645
      %v649 = vunpack.c.l.b16 %v594
      %v650 = vunpack.c.h.b16 %v594
      %v651 = vpack.c.b16 %v649, %v649
      %v652 = vpack.c.b16 %v650, %v650
      %653 = vrot.lane.b32.xlu0 %v651, 110
      %v654 = vpop.permute.xlu0 %653
      %655 = vrot.lane.b32.xlu0 %v652, 110
      %v656 = vpop.permute.xlu0 %655
      %vm657 = vcmask 900096
      %v658 = vsel %vm657, %v654, %v656
      %v660 = vunpack.c.l.b16 %v601
      %v661 = vunpack.c.h.b16 %v601
      %v662 = vpack.c.b16 %v660, %v660
      %v663 = vpack.c.b16 %v661, %v661
      %664 = vrot.lane.b32.xlu0 %v662, 96
      %v665 = vpop.permute.xlu0 %664
      %666 = vrot.lane.b32.xlu0 %v663, 96
      %v667 = vpop.permute.xlu0 %666
      %vm668 = vcmask 785408
      %v669 = vsel %vm668, %v665, %v667
      %670 = vrot.lane.b32.xlu0 %v459, 95
      %v671 = vpop.permute.xlu0 %670
      %672 = vrot.lane.b32.xlu0 %v460, 95
      %v673 = vpop.permute.xlu0 %672
      %vm674 = vcmask 777216
      %v675 = vsel %vm674, %v671, %v673
      %v677 = vunpack.c.l.b16 %v608
      %v678 = vunpack.c.h.b16 %v608
      %v679 = vpack.c.b16 %v677, %v677
      %v680 = vpack.c.b16 %v678, %v678
      %681 = vrot.lane.b32.xlu0 %v679, 94
      %v682 = vpop.permute.xlu0 %681
      %683 = vrot.lane.b32.xlu0 %v680, 94
      %v684 = vpop.permute.xlu0 %683
      %vm685 = vcmask 769024
      %v686 = vsel %vm685, %v682, %v684
      %v689 = vsel %vm534, %v612, %v619
      %v692 = vsel %vm534, %v613, %v617
      %v695 = vsel %vm534, %v630, %v641
      %v698 = vsel %vm534, %v628, %v639
      %v701 = vsel %vm534, %v647, %v658
      %v704 = vsel %vm534, %v645, %v656
      %v707 = vsel %vm534, %v669, %v675
      %v710 = vsel %vm534, %v667, %v673
      %v711 = vld [vmem:[%s2] sm:$0x3]
      %v712 = vld [vmem:[%s4] sm:$0xf]
      %714 = vset.pattern.permute.xlu0 0
      %715 = vperm.xlu0 %714, %v712
      %v716 = vpop.permute.xlu0 %715
      %726 = vrot.lane.b32.xlu0 %v537, 115
      %v727 = vpop.permute.xlu0 %726
      %728 = vrot.lane.b32.xlu0 %v540, 115
      %v729 = vpop.permute.xlu0 %728
      %730 = vrot.lane.b32.xlu0 %v543, 115
      %v731 = vpop.permute.xlu0 %730
      %732 = vrot.lane.b32.xlu0 %v546, 115
      %v733 = vpop.permute.xlu0 %732
      %734 = vrot.lane.b32.xlu0 %v549, 115
      %v735 = vpop.permute.xlu0 %734
      %736 = vrot.lane.b32.xlu0 %v552, 115
      %v737 = vpop.permute.xlu0 %736
      %738 = vrot.lane.b32.xlu0 %v555, 115
      %v739 = vpop.permute.xlu0 %738
      %740 = vrot.lane.b32.xlu0 %v558, 115
      %v741 = vpop.permute.xlu0 %740
      %742 = vrot.lane.b32.xlu0 %v533, 115
      %v743 = vpop.permute.xlu0 %742
      %744 = vrot.lane.b32.xlu0 %v531, 115
      %v745 = vpop.permute.xlu0 %744
      %v746 = vsel %vm447, %v727, %v729
      %v747 = vsel %vm447, %v731, %v733
      %v748 = vsel %vm447, %v735, %v737
      %v749 = vsel %vm447, %v739, %v741
      %v750 = vsel %vm447, %v743, %v745
      %vm755 = vcmask 588800
      %v757 = vsel %vm755, %v711, 0
      %v760 = vsel %vm534, %v750, 0
      %762 = vmatprep.subr.bf16.mxu0 0
      %763 = vmatpush1.bf16.msra.mxu0 0
      %764 = vmatprep.subr.bf16.mxu0 0
      %765 = vmatpush1.bf16.msra.mxu0 0
      %766 = vmatprep.subr.bf16.mxu0 0
      %767 = vmatpush1.bf16.msra.mxu0 0
      %768 = vmatprep.subr.bf16.mxu0 0
      %769 = vmatpush1.bf16.msra.mxu0 %v760
      %770 = vmatprep.subr.bf16.mxu0 0
      %771 = vmatpush1.bf16.msra.mxu0 %v749
      %772 = vmatprep.subr.bf16.mxu0 0
      %773 = vmatpush1.bf16.msra.mxu0 %v748
      %774 = vmatprep.subr.bf16.mxu0 0
      %775 = vmatpush1.bf16.msra.mxu0 %v747
      %776 = vmatprep.subr.bf16.mxu0 0
      %777 = vmatpush1.bf16.msra.mxu0 %v746
      %778 = vmatprep.subr.bf16.mxu0 0
      %779 = vmatpush2.bf16.msra.mxu0 0
      %780 = vmatprep.subr.bf16.mxu0 0
      %781 = vmatpush2.bf16.msra.mxu0 0
      %782 = vmatprep.subr.bf16.mxu0 0
      %783 = vmatpush2.bf16.msra.mxu0 0
      %784 = vmatprep.subr.bf16.mxu0 0
      %785 = vmatpush2.bf16.msra.mxu0 0
      %786 = vmatprep.subr.bf16.mxu0 0
      %787 = vmatpush2.bf16.msra.mxu0 0
      %788 = vmatprep.subr.bf16.mxu0 0
      %789 = vmatpush2.bf16.msra.mxu0 0
      %790 = vmatprep.subr.bf16.mxu0 0
      %791 = vmatpush2.bf16.msra.mxu0 0
      %792 = vmatprep.subr.bf16.mxu0 0
      %793 = vmatpush2.bf16.msra.mxu0 0
      %794 = vmatprep.mubr.bf16.mxu0 0
      %795 = vmatmul.mubr.bf16.gmra.mxu0 %v757
      %v796 = vpop.f32.mrf.mxu0
      %v797 = vadd.f32 %v716, %v796
      %v798 = vpop.f32.mrf.mxu0
      %v799 = vpop.f32.mrf.mxu0
      %v800 = vpop.f32.mrf.mxu0
      %801 = vdwg.mxu0
      %v802 = vld [vmem:[%s3] sm:$0x3]
      %v803 = vld [vmem:[%s5] sm:$0xf]
      %805 = vset.pattern.permute.xlu0 0
      %806 = vperm.xlu0 %805, %v803
      %v807 = vpop.permute.xlu0 %806
      %817 = vrot.lane.b32.xlu0 %v689, 81
      %v818 = vpop.permute.xlu0 %817
      %819 = vrot.lane.b32.xlu0 %v692, 81
      %v820 = vpop.permute.xlu0 %819
      %821 = vrot.lane.b32.xlu0 %v695, 81
      %v822 = vpop.permute.xlu0 %821
      %823 = vrot.lane.b32.xlu0 %v698, 81
      %v824 = vpop.permute.xlu0 %823
      %825 = vrot.lane.b32.xlu0 %v701, 81
      %v826 = vpop.permute.xlu0 %825
      %827 = vrot.lane.b32.xlu0 %v704, 81
      %v828 = vpop.permute.xlu0 %827
      %829 = vrot.lane.b32.xlu0 %v707, 81
      %v830 = vpop.permute.xlu0 %829
      %831 = vrot.lane.b32.xlu0 %v710, 81
      %v832 = vpop.permute.xlu0 %831
      %833 = vrot.lane.b32.xlu0 %v686, 81
      %v834 = vpop.permute.xlu0 %833
      %835 = vrot.lane.b32.xlu0 %v684, 81
      %v836 = vpop.permute.xlu0 %835
      %v837 = vsel %vm605, %v818, %v820
      %v838 = vsel %vm605, %v822, %v824
      %v839 = vsel %vm605, %v826, %v828
      %v840 = vsel %vm605, %v830, %v832
      %v841 = vsel %vm605, %v834, %v836
      %v847 = vsel %vm755, %v802, 0
      %v850 = vsel %vm534, %v841, 0
      %852 = vmatprep.subr.bf16.mxu0 0
      %853 = vmatpush1.bf16.msra.mxu0 0
      %854 = vmatprep.subr.bf16.mxu0 0
      %855 = vmatpush1.bf16.msra.mxu0 0
      %856 = vmatprep.subr.bf16.mxu0 0
      %857 = vmatpush1.bf16.msra.mxu0 0
      %858 = vmatprep.subr.bf16.mxu0 0
      %859 = vmatpush1.bf16.msra.mxu0 %v850
      %860 = vmatprep.subr.bf16.mxu0 0
      %861 = vmatpush1.bf16.msra.mxu0 %v840
      %862 = vmatprep.subr.bf16.mxu0 0
      %863 = vmatpush1.bf16.msra.mxu0 %v839
      %864 = vmatprep.subr.bf16.mxu0 0
      %865 = vmatpush1.bf16.msra.mxu0 %v838
      %866 = vmatprep.subr.bf16.mxu0 0
      %867 = vmatpush1.bf16.msra.mxu0 %v837
      %868 = vmatprep.subr.bf16.mxu0 0
      %869 = vmatpush2.bf16.msra.mxu0 0
      %870 = vmatprep.subr.bf16.mxu0 0
      %871 = vmatpush2.bf16.msra.mxu0 0
      %872 = vmatprep.subr.bf16.mxu0 0
      %873 = vmatpush2.bf16.msra.mxu0 0
      %874 = vmatprep.subr.bf16.mxu0 0
      %875 = vmatpush2.bf16.msra.mxu0 0
      %876 = vmatprep.subr.bf16.mxu0 0
      %877 = vmatpush2.bf16.msra.mxu0 0
      %878 = vmatprep.subr.bf16.mxu0 0
      %879 = vmatpush2.bf16.msra.mxu0 0
      %880 = vmatprep.subr.bf16.mxu0 0
      %881 = vmatpush2.bf16.msra.mxu0 0
      %882 = vmatprep.subr.bf16.mxu0 0
      %883 = vmatpush2.bf16.msra.mxu0 0
      %884 = vmatprep.mubr.bf16.mxu0 0
      %885 = vmatmul.mubr.bf16.gmra.mxu0 %v847
      %v886 = vpop.f32.mrf.mxu0
      %v887 = vadd.f32 %v807, %v886
      %v888 = vpop.f32.mrf.mxu0
      %v889 = vpop.f32.mrf.mxu0
      %v890 = vpop.f32.mrf.mxu0
      %891 = vdwg.mxu0
      %v892 = vsel %vm534, %v797, 0.0
      %v893 = vrot.slane %v892, 4
      %v894 = vadd.f32 %v892, %v893
      %v895 = vrot.slane %v894, 2
      %v896 = vadd.f32 %v894, %v895
      %v897 = vrot.slane %v896, 1
      %v898 = vadd.f32 %v896, %v897
      %v899 = vsel %vm534, %v887, 0.0
      %v900 = vrot.slane %v899, 4
      %v901 = vadd.f32 %v899, %v900
      %v902 = vrot.slane %v901, 2
      %v903 = vadd.f32 %v901, %v902
      %v904 = vrot.slane %v903, 1
      %v905 = vadd.f32 %v903, %v904
      %v906 = vadd.f32 %v898, %v905
      %v907 = vmul.f32 %v906, 0.125
      %v908 = vsel %vm534, %v797, -inf
      %v909 = vrot.slane %v908, 4
      %v910 = vmax.f32 %v908, %v909
      %v911 = vrot.slane %v910, 2
      %v912 = vmax.f32 %v910, %v911
      %v913 = vrot.slane %v912, 1
      %v914 = vmax.f32 %v912, %v913
      %v915 = vsel %vm534, %v887, -inf
      %v916 = vrot.slane %v915, 4
      %v917 = vmax.f32 %v915, %v916
      %v918 = vrot.slane %v917, 2
      %v919 = vmax.f32 %v917, %v918
      %v920 = vrot.slane %v919, 1
      %v921 = vmax.f32 %v919, %v920
      %v922 = vmax.f32 %v914, %v921
      %vm923 = vcmask 1040384
      %v924 = vsel %vm923, %v907, %v922
      %926 = vrot.lane.b32.xlu0 %v924, 112
      %v927 = vpop.permute.xlu0 %926
      %929 = vrot.lane.b32.xlu0 %v924, 96
      %v930 = vpop.permute.xlu0 %929
      %932 = vrot.lane.b32.xlu0 %v924, 80
      %v933 = vpop.permute.xlu0 %932
      %935 = vrot.lane.b32.xlu0 %v924, 64
      %v936 = vpop.permute.xlu0 %935
      %938 = vrot.lane.b32.xlu0 %v924, 48
      %v939 = vpop.permute.xlu0 %938
      %941 = vrot.lane.b32.xlu0 %v924, 32
      %v942 = vpop.permute.xlu0 %941
      %944 = vrot.lane.b32.xlu0 %v924, 16
      %v945 = vpop.permute.xlu0 %944
      %v947 = vcombine.low %v924, %v930
      %v949 = vunpack.c.l.s4 1983009808
      %v950 = vunpack.c.0.s8 %v949
      %v951 = vlaneseq
      %v952 = vshrl.u32 %v951, 7
      %v953 = vsub.s32 %v950, %v952
      %v954 = vrot.slane %v947, %v953
      %v955 = vcombine.low %v927, %v933
      %v957 = vunpack.c.l.s4 1983009808
      %v958 = vunpack.c.0.s8 %v957
      %v959 = vlaneseq
      %v960 = vshrl.u32 %v959, 7
      %v961 = vsub.s32 %v958, %v960
      %v962 = vrot.slane %v955, %v961
      %v963 = vcombine.low %v936, %v942
      %v965 = vunpack.c.l.s4 1983009808
      %v966 = vunpack.c.0.s8 %v965
      %v967 = vlaneseq
      %v968 = vshrl.u32 %v967, 7
      %v969 = vsub.s32 %v966, %v968
      %v970 = vrot.slane %v963, %v969
      %v971 = vcombine.low %v939, %v945
      %v973 = vunpack.c.l.s4 1983009808
      %v974 = vunpack.c.0.s8 %v973
      %v975 = vlaneseq
      %v976 = vshrl.u32 %v975, 7
      %v977 = vsub.s32 %v974, %v976
      %v978 = vrot.slane %v971, %v977
      %v979 = vcombine.low %v954, %v962
      %v981 = vunpack.c.l.s4 1934713408
      %v982 = vunpack.c.0.s8 %v981
      %v983 = vlaneseq
      %v984 = vshrl.u32 %v983, 7
      %v985 = vsub.s32 %v982, %v984
      %v986 = vrot.slane %v979, %v985
      %v987 = vcombine.low %v970, %v978
      %v989 = vunpack.c.l.s4 1934713408
      %v990 = vunpack.c.0.s8 %v989
      %v991 = vlaneseq
      %v992 = vshrl.u32 %v991, 7
      %v993 = vsub.s32 %v990, %v992
      %v994 = vrot.slane %v987, %v993
      %v995 = vcombine.low %v986, %v994
      %v996 = vcombine.high %v986, %v994
      %vm997 = vcmask 130048
      %v998 = vsel %vm997, %v995, -inf
      %999 = vmax.xlane.f32.xlu0 %v998
      %v1000 = vpop.xlane.xlu0 %999
      %v1001 = vsel %vm997, %v996, -inf
      %1002 = vmax.xlane.f32.xlu0 %v1001
      %v1003 = vpop.xlane.xlu0 %1002
      %v1004 = vsub.f32 %v995, %v1000
      %v1005 = vsub.f32 %v996, %v1003
      %v1006 = vmul.f32 %v1004, 1.442695
      %v1007 = vpow.pop %v1006
      %v1008 = vmul.f32 %v1005, 1.442695
      %v1009 = vpow.pop %v1008
      %v1010 = vsel %vm997, %v1007, 0.0
      %1011 = vadd.xlane.f32.xlu0 %v1010
      %v1012 = vpop.xlane.xlu0 %1011
      %v1013 = vsel %vm997, %v1009, 0.0
      %1014 = vadd.xlane.f32.xlu0 %v1013
      %v1015 = vpop.xlane.xlu0 %1014
      %v1016 = vrcp.pop %v1012
      %v1017 = vrcp.pop %v1015
      %v1018 = vmul.f32 %v1007, %v1016
      %v1019 = vmul.f32 %v1009, %v1017
      %v1020 = vcombine.high %v1018, 0.0
      %v1022 = vunpack.c.l.s4 1983009808
      %v1023 = vunpack.c.0.s8 %v1022
      %v1024 = vlaneseq
      %v1025 = vshrl.u32 %v1024, 7
      %v1026 = vsub.s32 %v1023, %v1025
      %v1027 = vrot.slane %v1018, %v1026
      %v1029 = vunpack.c.l.s4 1983009808
      %v1030 = vunpack.c.0.s8 %v1029
      %v1031 = vlaneseq
      %v1032 = vshrl.u32 %v1031, 7
      %v1033 = vsub.s32 %v1030, %v1032
      %v1034 = vrot.slane %v1020, %v1033
      %v1035 = vcombine.high %v1019, 0.0
      %v1037 = vunpack.c.l.s4 1983009808
      %v1038 = vunpack.c.0.s8 %v1037
      %v1039 = vlaneseq
      %v1040 = vshrl.u32 %v1039, 7
      %v1041 = vsub.s32 %v1038, %v1040
      %v1042 = vrot.slane %v1019, %v1041
      %v1044 = vunpack.c.l.s4 1983009808
      %v1045 = vunpack.c.0.s8 %v1044
      %v1046 = vlaneseq
      %v1047 = vshrl.u32 %v1046, 7
      %v1048 = vsub.s32 %v1045, %v1047
      %v1049 = vrot.slane %v1035, %v1048
      %v1050 = vcombine.low %v1027, %v1042
      %v1051 = vcombine.high %v1027, %v1042
      %v1053 = vunpack.c.l.s4 1934713408
      %v1054 = vunpack.c.0.s8 %v1053
      %v1055 = vlaneseq
      %v1056 = vshrl.u32 %v1055, 7
      %v1057 = vsub.s32 %v1054, %v1056
      %v1058 = vrot.slane %v1050, %v1057
      %v1060 = vunpack.c.l.s4 1934713408
      %v1061 = vunpack.c.0.s8 %v1060
      %v1062 = vlaneseq
      %v1063 = vshrl.u32 %v1062, 7
      %v1064 = vsub.s32 %v1061, %v1063
      %v1065 = vrot.slane %v1051, %v1064
      %v1066 = vcombine.low %v1034, %v1049
      %v1067 = vcombine.high %v1034, %v1049
      %v1069 = vunpack.c.l.s4 1934713408
      %v1070 = vunpack.c.0.s8 %v1069
      %v1071 = vlaneseq
      %v1072 = vshrl.u32 %v1071, 7
      %v1073 = vsub.s32 %v1070, %v1072
      %v1074 = vrot.slane %v1066, %v1073
      %v1076 = vunpack.c.l.s4 1934713408
      %v1077 = vunpack.c.0.s8 %v1076
      %v1078 = vlaneseq
      %v1079 = vshrl.u32 %v1078, 7
      %v1080 = vsub.s32 %v1077, %v1079
      %v1081 = vrot.slane %v1067, %v1080
      %v1082 = vcombine.high %v1058, 0.0
      %v1083 = vcombine.high %v1065, 0.0
      %v1084 = vcombine.high %v1074, 0.0
      %v1085 = vcombine.high %v1081, 0.0
      %1087 = vrot.lane.b32.xlu0 %v1082, 16
      %v1088 = vpop.permute.xlu0 %1087
      %1091 = vrot.lane.b32.xlu0 %v1065, 32
      %v1092 = vpop.permute.xlu0 %1091
      %1095 = vrot.lane.b32.xlu0 %v1083, 48
      %v1096 = vpop.permute.xlu0 %1095
      %1099 = vrot.lane.b32.xlu0 %v1074, 64
      %v1100 = vpop.permute.xlu0 %1099
      %1103 = vrot.lane.b32.xlu0 %v1084, 80
      %v1104 = vpop.permute.xlu0 %1103
      %1107 = vrot.lane.b32.xlu0 %v1081, 96
      %v1108 = vpop.permute.xlu0 %1107
      %1111 = vrot.lane.b32.xlu0 %v1085, 112
      %v1112 = vpop.permute.xlu0 %1111
      %v1114 = vsel %vm997, %v1058, %v1088
      %vm1115 = vcmask 261120
      %v1116 = vsel %vm1115, %v1114, %v1092
      %vm1117 = vcmask 392192
      %v1118 = vsel %vm1117, %v1116, %v1096
      %vm1119 = vcmask 523264
      %v1120 = vsel %vm1119, %v1118, %v1100
      %vm1121 = vcmask 654336
      %v1122 = vsel %vm1121, %v1120, %v1104
      %vm1123 = vcmask 785408
      %v1124 = vsel %vm1123, %v1122, %v1108
      %vm1125 = vcmask 916480
      %v1126 = vsel %vm1125, %v1124, %v1112
      %v1127 = vlaneseq
      %v1128 = vshrl.u32 %v1127, 7
      %v1129 = vsub.s32 0, %v1128
      %v1130 = vrot.slane %v1126, %v1129
      %v1131 = vmul.f32 %v797, %v1130
      %v1132 = vpack.c.bf16 %v1131, %v1131
      %v1133 = vlaneseq
      %v1134 = vshrl.u32 %v1133, 7
      %v1135 = vsub.s32 1, %v1134
      %v1136 = vrot.slane %v1126, %v1135
      %v1137 = vmul.f32 %v887, %v1136
      %v1138 = vpack.c.bf16 %v1137, %v1137
      %v1140 = vrot.slane %v1138, 6
      %vm1141 = vcmask 1041408
      %v1144 = vsel %vm1141, %v1132, %v1140
      %v1145 = vld [vmem:[%s6] sm:$0xf]
      %v1146 = vld [vmem:[%s7] sm:$0xff]
      %1148 = vset.pattern.permute.xlu0 0
      %1149 = vperm.xlu0 %1148, %v1146
      %v1150 = vpop.permute.xlu0 %1149
      %vm1152 = vcmask 64512
      %v1154 = vsel %vm1152, %v1145, 0
      %v1156 = vsel %vm534, %v1144, 0
      %1158 = vmatprep.subr.bf16.mxu0 0
      %1159 = vmatpush1.bf16.msra.mxu0 0
      %1160 = vmatprep.subr.bf16.mxu0 0
      %1161 = vmatpush1.bf16.msra.mxu0 0
      %1162 = vmatprep.subr.bf16.mxu0 0
      %1163 = vmatpush1.bf16.msra.mxu0 0
      %1164 = vmatprep.subr.bf16.mxu0 0
      %1165 = vmatpush1.bf16.msra.mxu0 0
      %1166 = vmatprep.subr.bf16.mxu0 0
      %1167 = vmatpush1.bf16.msra.mxu0 0
      %1168 = vmatprep.subr.bf16.mxu0 0
      %1169 = vmatpush1.bf16.msra.mxu0 0
      %1170 = vmatprep.subr.bf16.mxu0 0
      %1171 = vmatpush1.bf16.msra.mxu0 0
      %1172 = vmatprep.subr.bf16.mxu0 0
      %1173 = vmatpush1.bf16.msra.mxu0 %v1156
      %1174 = vmatprep.subr.bf16.mxu0 0
      %1175 = vmatpush2.bf16.msra.mxu0 0
      %1176 = vmatprep.subr.bf16.mxu0 0
      %1177 = vmatpush2.bf16.msra.mxu0 0
      %1178 = vmatprep.subr.bf16.mxu0 0
      %1179 = vmatpush2.bf16.msra.mxu0 0
      %1180 = vmatprep.subr.bf16.mxu0 0
      %1181 = vmatpush2.bf16.msra.mxu0 0
      %1182 = vmatprep.subr.bf16.mxu0 0
      %1183 = vmatpush2.bf16.msra.mxu0 0
      %1184 = vmatprep.subr.bf16.mxu0 0
      %1185 = vmatpush2.bf16.msra.mxu0 0
      %1186 = vmatprep.subr.bf16.mxu0 0
      %1187 = vmatpush2.bf16.msra.mxu0 0
      %1188 = vmatprep.subr.bf16.mxu0 0
      %1189 = vmatpush2.bf16.msra.mxu0 0
      %1190 = vmatprep.mubr.bf16.mxu0 0
      %1191 = vmatmul.mubr.bf16.gmra.mxu0 %v1154
      %v1192 = vpop.f32.mrf.mxu0
      %v1193 = vadd.f32 %v1150, %v1192
      %v1194 = vpop.f32.mrf.mxu0
      %v1195 = vpop.f32.mrf.mxu0
      %v1196 = vpop.f32.mrf.mxu0
      %1197 = vdwg.mxu0
      %v1198 = vld [vmem:[%s362] sm:$0xff]
      %v1199 = vmul.f32 %v1198, %v1193
      %1200 = vst [vmem:[%s370] sm:$0xff] %v1199
      %p1201 = scmp.lt.s32.totalorder %s23, 1
      %s1202 = scalar_select %p1201, %s23, 1
      %p1203 = scmp.lt.s32.totalorder %s24, 1
      %s1204 = scalar_select %p1203, %s24, 1
      %s1205 = smul.addr %s1202, 2
      %s1206 = sadd.s32 %s1204, %s1205
      %s1207 = smul.addr %s1206, 8
      %s1208 = scalar_lea.vmem %s8, %s1207
      // Predicated region
      $region53: #{tc_forward.1} parent=51 // pred_check
        %p1209 = pneg %p233
      $region54: #{tc_forward.1} parent=51 // pred_check_branch
        %1211 = sbr.rel (%p1209) target = $region56
      $region55: #{tc_forward.1} parent=51 // pred_region
        _
      $region56: #{tc_forward.1} parent=51 // pred_fallthru
        _
    $region52: #{tc_forward.1} parent=5 // pred_fallthru
      _
    %p1212 = scmp.le.s32.totalorder 2, %s14
    // Predicated region
    $region57: #{tc_forward.1} parent=5 // pred_check
      %p1213 = pneg %p1212
    $region58: #{tc_forward.1} parent=5 // pred_check_branch
      %1215 = sbr.rel (%p1213) target = $region60
    $region59: #{tc_forward.1} parent=5 // pred_region
      %s1216 = ssub.s32 %s14, 2
      // Predicated region
      $region61: #{tc_forward.1} parent=59 // pred_check
        %p1217 = pneg %p239
      $region62: #{tc_forward.1} parent=59 // pred_check_branch
        %1219 = sbr.rel (%p1217) target = $region64
      $region63: #{tc_forward.1} parent=59 // pred_region
        %p1220 = scmp.lt.s32.totalorder %s25, 1
        %s1221 = scalar_select %p1220, %s25, 1
        %p1222 = scmp.lt.s32.totalorder %s26, 1
        %s1223 = scalar_select %p1222, %s26, 1
        %s1224 = smul.addr %s1221, 2
        %s1225 = sadd.s32 %s1223, %s1224
        %s1226 = smul.addr %s1225, 8
        %s1227 = scalar_lea.vmem %s8, %s1226
      $region64: #{tc_forward.1} parent=59 // pred_fallthru
        _
    $region60: #{tc_forward.1} parent=5 // pred_fallthru
      _
  $region6: #{tc_forward.1} parent=0 // loop_footer
    %s18 = sadd.s32 1, %s14
  $region7: #{tc_forward.1} parent=0 // loop_footer_branch
    %13 = sbr.rel target = $region3
  $region8: #{tc_forward.1} parent=0 // loop_exit
    _

</llo_original>
